<compile_context>
chip_gen: v5e
topology: v5e:2x2
jax: 0.10.0
libtpu: 0.0.40
codegen_flags: <defaults>
</compile_context>

<pallas_src>
import functools
import math

import numpy as np
import jax
import jax.numpy as jnp
from jax.experimental import pallas as pl
from jax.experimental.pallas import tpu as pltpu

LANE = 128
# bf16 operands + f32 MXU accumulation (tolerances asserted in __main__).
# For very large numtaps switch this to jnp.float32: the kernel is HBM-bound,
# so the extra MXU passes are free.
OPERAND_DTYPE = jnp.bfloat16


# ----------------------- filter design (host-side numpy) -----------------------
def _hz_to_erb(hz):
    EarQ = 9.26449
    minBW = 24.7
    return hz / EarQ + minBW


def design_gammatone_fir(freq, samplerate, order=4, numtaps=32, band_width_factor=1.0):
    """FIR gammatone coefficients (scipy.signal.gammatone 'fir' branch)."""
    freq = float(freq)
    samplerate = float(samplerate)
    assert 0 < freq < samplerate / 2
    t = np.arange(numtaps) / samplerate
    bw = 1.019 * _hz_to_erb(freq) * band_width_factor
    b = t ** (order - 1) * np.exp(-2 * np.pi * bw * t)
    b = b * np.cos(2 * np.pi * freq * t)
    scale_factor = 2 * (2 * np.pi * bw) ** order
    scale_factor /= float(math.factorial(order - 1))
    scale_factor /= samplerate
    return (b * scale_factor).astype(np.float32)


def _build_weight(b_np, nbk, rN):
    """Constant anti-band matrix: W[qq, mm] = b[mm + qq - (127 + rN)], 0 outside [0, L)."""
    L = b_np.shape[0]
    off = (LANE - 1) + rN
    qq = np.arange(nbk * LANE)[:, None]
    mm = np.arange(LANE)[None, :]
    idx = mm + qq - off
    valid = (idx >= 0) & (idx < L)
    return np.where(valid, b_np[np.clip(idx, 0, L - 1)], 0.0).astype(np.float32)


# ----------------------------- Pallas kernel (hot path) -------------------------
def _banded_kernel(*refs, m_sub, nbk, Nb, rN, n_xb):
    """refs = (x_0, ..., x_{U-1}, w, out),  U = m_sub + nbk - 1.

    x_u : (r_tile, 128) f32  aligned x block  Nb - m_sub*(jg+1) + u  (clamped)
    w   : (nbk*128, 128)     constant anti-band weights (resident in VMEM)
    out : (r_tile, c_tile) f32  output column tile jg

    Output sub-column jo = jg*m_sub + jr accumulates nbk dots of x block
    Nb-1-jo+t against w rows [t*128, (t+1)*128).
    """
    U = m_sub + nbk - 1
    x_refs = refs[:U]
    w_ref = refs[U]
    o_ref = refs[U + 1]

    jg = pl.program_id(1)
    b0 = Nb - m_sub * (jg + 1)                 # (unclamped) x block carried by spec u=0
    r_tile = x_refs[0].shape[0]
    if rN > 0:
        lane = jax.lax.broadcasted_iota(jnp.int32, (r_tile, LANE), 1)

    # Mask out-of-range / partial x blocks (this realizes the convolution's
    # implicit left/right zero padding) and cast f32 -> bf16 in-kernel.
    xs = []
    for u in range(U):
        bi = b0 + u
        v = x_refs[u][...]
        mask = jnp.logical_and(bi >= 0, bi < n_xb)
        if rN > 0:                              # ragged last data block: keep lanes < rN
            mask = jnp.logical_and(mask, jnp.logical_or(bi != n_xb - 1, lane < rN))
        xs.append(jnp.where(mask, v, 0.0).astype(OPERAND_DTYPE))

    c_blk = o_ref.shape[1]
    for jr in range(m_sub):                     # m_sub output 128-lane sub-columns
        acc = None
        for t in range(nbk):
            d = jnp.dot(xs[m_sub - 1 - jr + t],
                        w_ref[t * LANE:(t + 1) * LANE, :],
                        preferred_element_type=jnp.float32)
            acc = d if acc is None else acc + d
        w_cols = min(LANE, c_blk - jr * LANE)   # only < 128 in the degenerate M < 128 case
        o_ref[:, jr * LANE:jr * LANE + w_cols] = acc[:, :w_cols]


def _x_index_map(ri, jg, *, u, Nb, m_sub, n_xb):
    bi = Nb - m_sub * (jg + 1) + u
    return ri, jnp.clip(bi, 0, n_xb - 1)        # clamp; invalid blocks are zeroed in-kernel


# --------------------------------- wrapper ---------------------------------------
def _gammatone_conv(x, *, b_np, L):
    """x: (B, C, N) float -> (B, C, N + L - 1) float32 (== fft_conv(flip(x), b).real)."""
    B, C, N = x.shape
    R = B * C
    M = N + L - 1

    Nb, rN = divmod(N, LANE)
    n_xb = pl.cdiv(N, LANE)                     # aligned 128-blocks of x
    nbk = max(1, 2 + (rN + L - 2) // LANE)      # x blocks feeding one output sub-column

    # Host-built compile-time constant weights (stay resident in VMEM).
    w = jnp.asarray(_build_weight(b_np, nbk, rN), dtype=OPERAND_DTYPE)

    x2 = x.reshape(R, N)                        # free leading-dim reshape
    if N < LANE:                                # degenerate tiny-N case only
        x2 = jnp.pad(x2, ((0, 0), (0, LANE - N)))

    # Column tiling: m_sub 128-lane output sub-columns per grid step share one
    # resident w -> halo reads amortized, wide unmasked output stores.
    if M < LANE:
        m_sub, c_tile = 1, M
    else:
        m_sub = max(1, min(8, M // LANE))       # guarantees c_tile <= M
        c_tile = m_sub * LANE
    grid_c = pl.cdiv(M, c_tile)

    r_tile = 256 if R > 256 else R              # block never exceeds array dims
    grid_r = pl.cdiv(R, r_tile)

    U = m_sub + nbk - 1
    x_specs = [
        pl.BlockSpec((r_tile, LANE),
                     functools.partial(_x_index_map, u=u, Nb=Nb,
                                       m_sub=m_sub, n_xb=n_xb))
        for u in range(U)]
    w_spec = pl.BlockSpec((nbk * LANE, LANE), lambda ri, jg: (0, 0))
    out_spec = pl.BlockSpec((r_tile, c_tile), lambda ri, jg: (ri, jg))

    kernel = functools.partial(_banded_kernel, m_sub=m_sub, nbk=nbk,
                               Nb=Nb, rN=rN, n_xb=n_xb)

    flops = 2 * grid_r * grid_c * m_sub * nbk * r_tile * LANE * LANE
    bytes_accessed = (grid_r * grid_c * U * r_tile * LANE * 4   # x reads (f32, incl. halo)
                      + R * M * 4                               # exact f32 output
                      + nbk * LANE * LANE * 2)                  # resident weights

    out = pl.pallas_call(
        kernel,
        out_shape=jax.ShapeDtypeStruct((R, M), jnp.float32),
        grid=(grid_r, grid_c),
        in_specs=x_specs + [w_spec],
        out_specs=out_spec,
        compiler_params=pltpu.CompilerParams(
            dimension_semantics=("parallel", "parallel")),
        cost_estimate=pl.CostEstimate(flops=flops, transcendentals=0,
                                      bytes_accessed=bytes_accessed),
    )(*([x2] * U), w)

    return out.reshape(B, C, M)


def make_gammatone_forward(b_np):
    """Returns a jitted forward(x) equivalent to GammatoneFilter.forward.

    The module's F.conv1d(...) call is dead code (result discarded) and is
    intentionally not executed.
    """
    b_np = np.asarray(b_np, dtype=np.float32)
    L = int(b_np.shape[0])
    assert L >= 1

    @jax.jit
    def forward(x):
        return _gammatone_conv(x, b_np=b_np, L=L)

    return forward


# --------------------------------------- main -----------------------------------
if __name__ == "__main__":
    def full_conv_ref(x_np, b_arr):
        """f64 reference: conv_full(flip(x), b) == module's fft_conv output."""
        Bq, Cq, _ = x_np.shape
        b64 = np.asarray(b_arr, np.float64)
        return np.stack([np.stack([
            np.convolve(np.asarray(x_np[bi, ci], np.float64)[::-1], b64, mode="full")
            for ci in range(Cq)]) for bi in range(Bq)])

    samplerate = 16000.0
    # C = 1: the module's (discarded) F.conv1d weight is (1, 1, numtaps) ->
    # single input channel.
    configs = [
        # (B, C, N, numtaps, center_freq)
        (2, 1, 250, 32, 1000.0),     # ragged N (N%128=122) and ragged M (M%128=25)
        (3, 1, 256, 128, 2500.0),    # aligned N, module's default numtaps
    ]

    key = jax.random.PRNGKey(0)
    for (B, C, N, numtaps, cf) in configs:
        b_np = design_gammatone_fir(cf, samplerate, order=4, numtaps=numtaps)
        forward = make_gammatone_forward(b_np)

        key, sub = jax.random.split(key)
        x = jax.random.normal(sub, (B, C, N), dtype=jnp.float32)

        y = jax.block_until_ready(forward(x))
        M = N + numtaps - 1
        assert y.shape == (B, C, M), (y.shape, (B, C, M))
        y_np = np.asarray(y, np.float64)

        # Reference 1: exact f64 full conv of the flipped signal.
        ref = full_conv_ref(np.asarray(x), b_np)

        # Reference 2: same math with the kernel's intentional bf16 operand
        # quantization (f64 accumulation) -> tight tolerance proves the
        # kernel's indexing / edge masking / accumulation are exact.
        x_q = np.asarray(jnp.asarray(x).astype(jnp.bfloat16).astype(jnp.float32))
        b_q = np.asarray(jnp.asarray(b_np).astype(jnp.bfloat16).astype(jnp.float32))
        ref_q = full_conv_ref(x_q, b_q)

        err_q = float(np.max(np.abs(y_np - ref_q)))
        err_f = float(np.max(np.abs(y_np - ref)))
        assert np.allclose(y_np, ref_q, atol=5e-5, rtol=1e-3), err_q
        assert np.allclose(y_np, ref, atol=5e-3, rtol=2e-2), err_f

    print("KERNEL_OK")
</pallas_src>

<mosaic_0001>
module attributes {stable_mosaic.version = 11 : i64} {
  func.func @_banded_kernel(%arg0: i32, %arg1: i32, %arg2: memref<2x128xf32, #tpu.memory_space<vmem>>, %arg3: memref<2x128xf32, #tpu.memory_space<vmem>>, %arg4: memref<2x128xf32, #tpu.memory_space<vmem>>, %arg5: memref<2x128xf32, #tpu.memory_space<vmem>>, %arg6: memref<384x128xbf16, #tpu.memory_space<vmem>>, %arg7: memref<2x256xf32, #tpu.memory_space<vmem>>) attributes {dimension_semantics = [#tpu.dimension_semantics<parallel>, #tpu.dimension_semantics<parallel>], iteration_bounds = array<i64: 1, 2>, scalar_prefetch = 0 : i64, scratch_operands = 0 : i64, tpu.core_type = #tpu.core_type<tc>, window_params = [{transform_indices = @transform_0, window_bounds = array<i64: 2, 128>}, {transform_indices = @transform_1, window_bounds = array<i64: 2, 128>}, {transform_indices = @transform_2, window_bounds = array<i64: 2, 128>}, {transform_indices = @transform_3, window_bounds = array<i64: 2, 128>}, {pipeline_mode = #tpu.pipeline_mode<synchronous>, transform_indices = @transform_4, window_bounds = array<i64: 384, 128>}, {transform_indices = @transform_5, window_bounds = array<i64: 2, 256>}]} {
    %c1_i32 = arith.constant 1 : i32
    %0 = arith.addi %arg1, %c1_i32 : i32
    %c2_i32 = arith.constant 2 : i32
    %1 = arith.muli %c2_i32, %0 : i32
    %c1_i32_0 = arith.constant 1 : i32
    %2 = arith.subi %c1_i32_0, %1 : i32
    %3 = tpu.iota {dimensions = array<i32: 1>} : vector<2x128xi32>
    %c0_i32 = arith.constant 0 : i32
    %4 = arith.addi %2, %c0_i32 : i32
    %c0 = arith.constant 0 : index
    %c0_1 = arith.constant 0 : index
    %5 = vector.load %arg2[%c0, %c0_1] : memref<2x128xf32, #tpu.memory_space<vmem>>, vector<2x128xf32>
    %c0_i32_2 = arith.constant 0 : i32
    %6 = arith.cmpi sge, %4, %c0_i32_2 : i32
    %c2_i32_3 = arith.constant 2 : i32
    %7 = arith.cmpi slt, %4, %c2_i32_3 : i32
    %8 = arith.andi %6, %7 : i1
    %c1_i32_4 = arith.constant 1 : i32
    %9 = arith.cmpi ne, %4, %c1_i32_4 : i32
    %c122_i32 = arith.constant 122 : i32
    %10 = vector.broadcast %c122_i32 : i32 to vector<2x128xi32>
    %11 = arith.cmpi slt, %3, %10 : vector<2x128xi32>
    %12 = vector.broadcast %9 : i1 to vector<2x128xi1>
    %13 = arith.ori %12, %11 : vector<2x128xi1>
    %14 = vector.broadcast %8 : i1 to vector<2x128xi1>
    %15 = arith.andi %14, %13 : vector<2x128xi1>
    %cst = arith.constant 0.000000e+00 : f32
    %16 = vector.broadcast %cst : f32 to vector<2x128xf32>
    %17 = arith.select %15, %5, %16 : vector<2x128xi1>, vector<2x128xf32>
    %18 = arith.truncf %17 : vector<2x128xf32> to vector<2x128xbf16>
    %c1_i32_5 = arith.constant 1 : i32
    %19 = arith.addi %2, %c1_i32_5 : i32
    %c0_6 = arith.constant 0 : index
    %c0_7 = arith.constant 0 : index
    %20 = vector.load %arg3[%c0_6, %c0_7] : memref<2x128xf32, #tpu.memory_space<vmem>>, vector<2x128xf32>
    %c0_i32_8 = arith.constant 0 : i32
    %21 = arith.cmpi sge, %19, %c0_i32_8 : i32
    %c2_i32_9 = arith.constant 2 : i32
    %22 = arith.cmpi slt, %19, %c2_i32_9 : i32
    %23 = arith.andi %21, %22 : i1
    %c1_i32_10 = arith.constant 1 : i32
    %24 = arith.cmpi ne, %19, %c1_i32_10 : i32
    %c122_i32_11 = arith.constant 122 : i32
    %25 = vector.broadcast %c122_i32_11 : i32 to vector<2x128xi32>
    %26 = arith.cmpi slt, %3, %25 : vector<2x128xi32>
    %27 = vector.broadcast %24 : i1 to vector<2x128xi1>
    %28 = arith.ori %27, %26 : vector<2x128xi1>
    %29 = vector.broadcast %23 : i1 to vector<2x128xi1>
    %30 = arith.andi %29, %28 : vector<2x128xi1>
    %cst_12 = arith.constant 0.000000e+00 : f32
    %31 = vector.broadcast %cst_12 : f32 to vector<2x128xf32>
    %32 = arith.select %30, %20, %31 : vector<2x128xi1>, vector<2x128xf32>
    %33 = arith.truncf %32 : vector<2x128xf32> to vector<2x128xbf16>
    %c2_i32_13 = arith.constant 2 : i32
    %34 = arith.addi %2, %c2_i32_13 : i32
    %c0_14 = arith.constant 0 : index
    %c0_15 = arith.constant 0 : index
    %35 = vector.load %arg4[%c0_14, %c0_15] : memref<2x128xf32, #tpu.memory_space<vmem>>, vector<2x128xf32>
    %c0_i32_16 = arith.constant 0 : i32
    %36 = arith.cmpi sge, %34, %c0_i32_16 : i32
    %c2_i32_17 = arith.constant 2 : i32
    %37 = arith.cmpi slt, %34, %c2_i32_17 : i32
    %38 = arith.andi %36, %37 : i1
    %c1_i32_18 = arith.constant 1 : i32
    %39 = arith.cmpi ne, %34, %c1_i32_18 : i32
    %c122_i32_19 = arith.constant 122 : i32
    %40 = vector.broadcast %c122_i32_19 : i32 to vector<2x128xi32>
    %41 = arith.cmpi slt, %3, %40 : vector<2x128xi32>
    %42 = vector.broadcast %39 : i1 to vector<2x128xi1>
    %43 = arith.ori %42, %41 : vector<2x128xi1>
    %44 = vector.broadcast %38 : i1 to vector<2x128xi1>
    %45 = arith.andi %44, %43 : vector<2x128xi1>
    %cst_20 = arith.constant 0.000000e+00 : f32
    %46 = vector.broadcast %cst_20 : f32 to vector<2x128xf32>
    %47 = arith.select %45, %35, %46 : vector<2x128xi1>, vector<2x128xf32>
    %48 = arith.truncf %47 : vector<2x128xf32> to vector<2x128xbf16>
    %c3_i32 = arith.constant 3 : i32
    %49 = arith.addi %2, %c3_i32 : i32
    %c0_21 = arith.constant 0 : index
    %c0_22 = arith.constant 0 : index
    %50 = vector.load %arg5[%c0_21, %c0_22] : memref<2x128xf32, #tpu.memory_space<vmem>>, vector<2x128xf32>
    %c0_i32_23 = arith.constant 0 : i32
    %51 = arith.cmpi sge, %49, %c0_i32_23 : i32
    %c2_i32_24 = arith.constant 2 : i32
    %52 = arith.cmpi slt, %49, %c2_i32_24 : i32
    %53 = arith.andi %51, %52 : i1
    %c1_i32_25 = arith.constant 1 : i32
    %54 = arith.cmpi ne, %49, %c1_i32_25 : i32
    %c122_i32_26 = arith.constant 122 : i32
    %55 = vector.broadcast %c122_i32_26 : i32 to vector<2x128xi32>
    %56 = arith.cmpi slt, %3, %55 : vector<2x128xi32>
    %57 = vector.broadcast %54 : i1 to vector<2x128xi1>
    %58 = arith.ori %57, %56 : vector<2x128xi1>
    %59 = vector.broadcast %53 : i1 to vector<2x128xi1>
    %60 = arith.andi %59, %58 : vector<2x128xi1>
    %cst_27 = arith.constant 0.000000e+00 : f32
    %61 = vector.broadcast %cst_27 : f32 to vector<2x128xf32>
    %62 = arith.select %60, %50, %61 : vector<2x128xi1>, vector<2x128xf32>
    %63 = arith.truncf %62 : vector<2x128xf32> to vector<2x128xbf16>
    %c0_28 = arith.constant 0 : index
    %c0_29 = arith.constant 0 : index
    %64 = vector.load %arg6[%c0_28, %c0_29] : memref<384x128xbf16, #tpu.memory_space<vmem>>, vector<128x128xbf16>
    %cst_30 = arith.constant dense<0.000000e+00> : vector<2x128xf32>
    %65 = tpu.matmul %33, %64, %cst_30 {dimension_numbers = #tpu.dot_dimension_numbers<[1], [0], [0], [1], [0, 0, 1, 1], [], []>} : vector<2x128xbf16>, vector<128x128xbf16>, vector<2x128xf32> -> vector<2x128xf32>
    %c128 = arith.constant 128 : index
    %c0_31 = arith.constant 0 : index
    %66 = vector.load %arg6[%c128, %c0_31] : memref<384x128xbf16, #tpu.memory_space<vmem>>, vector<128x128xbf16>
    %cst_32 = arith.constant dense<0.000000e+00> : vector<2x128xf32>
    %67 = tpu.matmul %48, %66, %cst_32 {dimension_numbers = #tpu.dot_dimension_numbers<[1], [0], [0], [1], [0, 0, 1, 1], [], []>} : vector<2x128xbf16>, vector<128x128xbf16>, vector<2x128xf32> -> vector<2x128xf32>
    %68 = arith.addf %65, %67 : vector<2x128xf32>
    %c256 = arith.constant 256 : index
    %c0_33 = arith.constant 0 : index
    %69 = vector.load %arg6[%c256, %c0_33] : memref<384x128xbf16, #tpu.memory_space<vmem>>, vector<128x128xbf16>
    %cst_34 = arith.constant dense<0.000000e+00> : vector<2x128xf32>
    %70 = tpu.matmul %63, %69, %cst_34 {dimension_numbers = #tpu.dot_dimension_numbers<[1], [0], [0], [1], [0, 0, 1, 1], [], []>} : vector<2x128xbf16>, vector<128x128xbf16>, vector<2x128xf32> -> vector<2x128xf32>
    %71 = arith.addf %68, %70 : vector<2x128xf32>
    %c0_35 = arith.constant 0 : index
    %c0_36 = arith.constant 0 : index
    %72 = vector.load %arg7[%c0_35, %c0_36] : memref<2x256xf32, #tpu.memory_space<vmem>>, vector<2x128xf32>
    tpu.vector_store %arg7[%c0_35, %c0_36], %71 {strides = array<i32>} : memref<2x256xf32, #tpu.memory_space<vmem>>, vector<2x128xf32>,
    %c0_37 = arith.constant 0 : index
    %c0_38 = arith.constant 0 : index
    %73 = vector.load %arg6[%c0_37, %c0_38] : memref<384x128xbf16, #tpu.memory_space<vmem>>, vector<128x128xbf16>
    %cst_39 = arith.constant dense<0.000000e+00> : vector<2x128xf32>
    %74 = tpu.matmul %18, %73, %cst_39 {dimension_numbers = #tpu.dot_dimension_numbers<[1], [0], [0], [1], [0, 0, 1, 1], [], []>} : vector<2x128xbf16>, vector<128x128xbf16>, vector<2x128xf32> -> vector<2x128xf32>
    %c128_40 = arith.constant 128 : index
    %c0_41 = arith.constant 0 : index
    %75 = vector.load %arg6[%c128_40, %c0_41] : memref<384x128xbf16, #tpu.memory_space<vmem>>, vector<128x128xbf16>
    %cst_42 = arith.constant dense<0.000000e+00> : vector<2x128xf32>
    %76 = tpu.matmul %33, %75, %cst_42 {dimension_numbers = #tpu.dot_dimension_numbers<[1], [0], [0], [1], [0, 0, 1, 1], [], []>} : vector<2x128xbf16>, vector<128x128xbf16>, vector<2x128xf32> -> vector<2x128xf32>
    %77 = arith.addf %74, %76 : vector<2x128xf32>
    %c256_43 = arith.constant 256 : index
    %c0_44 = arith.constant 0 : index
    %78 = vector.load %arg6[%c256_43, %c0_44] : memref<384x128xbf16, #tpu.memory_space<vmem>>, vector<128x128xbf16>
    %cst_45 = arith.constant dense<0.000000e+00> : vector<2x128xf32>
    %79 = tpu.matmul %48, %78, %cst_45 {dimension_numbers = #tpu.dot_dimension_numbers<[1], [0], [0], [1], [0, 0, 1, 1], [], []>} : vector<2x128xbf16>, vector<128x128xbf16>, vector<2x128xf32> -> vector<2x128xf32>
    %80 = arith.addf %77, %79 : vector<2x128xf32>
    %c0_46 = arith.constant 0 : index
    %c128_47 = arith.constant 128 : index
    %81 = vector.load %arg7[%c0_46, %c128_47] : memref<2x256xf32, #tpu.memory_space<vmem>>, vector<2x128xf32>
    tpu.vector_store %arg7[%c0_46, %c128_47], %80 {strides = array<i32>} : memref<2x256xf32, #tpu.memory_space<vmem>>, vector<2x128xf32>,
    return
  }
  func.func @transform_0(%arg0: i32, %arg1: i32) -> (i32, i32) {
    %c1_i32 = arith.constant 1 : i32
    %0 = arith.addi %arg1, %c1_i32 : i32
    %c2_i32 = arith.constant 2 : i32
    %1 = arith.muli %c2_i32, %0 : i32
    %c1_i32_0 = arith.constant 1 : i32
    %2 = arith.subi %c1_i32_0, %1 : i32
    %c0_i32 = arith.constant 0 : i32
    %3 = arith.addi %2, %c0_i32 : i32
    %c0_i32_1 = arith.constant 0 : i32
    %c1_i32_2 = arith.constant 1 : i32
    %4 = arith.maxsi %c0_i32_1, %3 : i32
    %5 = arith.minsi %c1_i32_2, %4 : i32
    %c0_i32_3 = arith.constant 0 : i32
    return %arg0, %5 : i32, i32
  }
  func.func @transform_1(%arg0: i32, %arg1: i32) -> (i32, i32) {
    %c1_i32 = arith.constant 1 : i32
    %0 = arith.addi %arg1, %c1_i32 : i32
    %c2_i32 = arith.constant 2 : i32
    %1 = arith.muli %c2_i32, %0 : i32
    %c1_i32_0 = arith.constant 1 : i32
    %2 = arith.subi %c1_i32_0, %1 : i32
    %c1_i32_1 = arith.constant 1 : i32
    %3 = arith.addi %2, %c1_i32_1 : i32
    %c0_i32 = arith.constant 0 : i32
    %c1_i32_2 = arith.constant 1 : i32
    %4 = arith.maxsi %c0_i32, %3 : i32
    %5 = arith.minsi %c1_i32_2, %4 : i32
    %c0_i32_3 = arith.constant 0 : i32
    return %arg0, %5 : i32, i32
  }
  func.func @transform_2(%arg0: i32, %arg1: i32) -> (i32, i32) {
    %c1_i32 = arith.constant 1 : i32
    %0 = arith.addi %arg1, %c1_i32 : i32
    %c2_i32 = arith.constant 2 : i32
    %1 = arith.muli %c2_i32, %0 : i32
    %c1_i32_0 = arith.constant 1 : i32
    %2 = arith.subi %c1_i32_0, %1 : i32
    %c2_i32_1 = arith.constant 2 : i32
    %3 = arith.addi %2, %c2_i32_1 : i32
    %c0_i32 = arith.constant 0 : i32
    %c1_i32_2 = arith.constant 1 : i32
    %4 = arith.maxsi %c0_i32, %3 : i32
    %5 = arith.minsi %c1_i32_2, %4 : i32
    %c0_i32_3 = arith.constant 0 : i32
    return %arg0, %5 : i32, i32
  }
  func.func @transform_3(%arg0: i32, %arg1: i32) -> (i32, i32) {
    %c1_i32 = arith.constant 1 : i32
    %0 = arith.addi %arg1, %c1_i32 : i32
    %c2_i32 = arith.constant 2 : i32
    %1 = arith.muli %c2_i32, %0 : i32
    %c1_i32_0 = arith.constant 1 : i32
    %2 = arith.subi %c1_i32_0, %1 : i32
    %c3_i32 = arith.constant 3 : i32
    %3 = arith.addi %2, %c3_i32 : i32
    %c0_i32 = arith.constant 0 : i32
    %c1_i32_1 = arith.constant 1 : i32
    %4 = arith.maxsi %c0_i32, %3 : i32
    %5 = arith.minsi %c1_i32_1, %4 : i32
    %c0_i32_2 = arith.constant 0 : i32
    return %arg0, %5 : i32, i32
  }
  func.func @transform_4(%arg0: i32, %arg1: i32) -> (i32, i32) {
    %c0_i32 = arith.constant 0 : i32
    %c0_i32_0 = arith.constant 0 : i32
    %c0_i32_1 = arith.constant 0 : i32
    return %c0_i32, %c0_i32_0 : i32, i32
  }
  func.func @transform_5(%arg0: i32, %arg1: i32) -> (i32, i32) {
    %c0_i32 = arith.constant 0 : i32
    return %arg0, %arg1 : i32, i32
  }
}

</mosaic_0001>

<llo_original>
// kernel: forward.1
$region0: #{forward.1}
  #allocation0 [shape = 'u32[]', space=smem, size = 0x4, offset = 0x4, fixed_abs, tag = 'smem constant byte address 0x4 - core index']
  #allocation1 [shape = 'u32[72,128]{1,0:T(1,128)}', space=vmem, size = 0x9000, scoped, tag = 'internal scratch']
  %s0 = inlined_call_operand.vmem [shape: f32[2,250], index: 0, kind: input, shape index: {}, may-alias: {0,1,2,3}]
  %s1 = inlined_call_operand.vmem [shape: f32[2,250], index: 1, kind: input, shape index: {}, may-alias: {0,1,2,3}]
  %s2 = inlined_call_operand.vmem [shape: f32[2,250], index: 2, kind: input, shape index: {}, may-alias: {0,1,2,3}]
  %s3 = inlined_call_operand.vmem [shape: f32[2,250], index: 3, kind: input, shape index: {}, may-alias: {0,1,2,3}]
  %s4 = inlined_call_operand.hbm [shape: bf16[384,128], index: 4, kind: input, shape index: {}]
  %s5 = inlined_call_operand.vmem [shape: f32[2,281], index: 5, kind: output, shape index: {}]
  %s6 = sld [smem:[#allocation0]]
  $region119: #{forward.1} parent=0
    _
  %s8 = ssub.s32 1, %s6
  %s9 = scalar_select 0, %s8, %s6
  $region1: #{forward.1} parent=0
    #allocation2 [shape = 'u8[98304]{0}', space=vmem, size = 0x18000, scoped, tag = 'input window, operand 4, single buffered']
    #allocation3 [shape = 's32[2]{0}', space=sflag, size = 0x8, scoped, tag = 'scoped memory for forward.1']
    #allocation4 [shape = 'u8[4096]{0}', space=vmem, size = 0x1000, scoped, tag = 'output window, operand 0']
    %10 = vsyncpa [#allocation3], 0
    loop: start=0, step=1, limit=4
    $region2: #{forward.1} parent=1 // loop_pre_header
      _
    $region3: #{forward.1} parent=1 // loop_header
      %s12 = sphi 0, %s16
      %p13 = scmp.ge.s32.totalorder %s12, 4
      %s19 = sphi 0, %s31
      %s20 = sphi 0, %s27
      %s21 = sphi 0, %s19
      %s22 = sphi 0, %s20
      %s23 = sphi 0, %s21
      %s24 = sphi 0, %s22
      %s50 = sphi 0, %s52
      %s53 = sphi 0, %s50
      %s54 = sphi 0, %s53
      %s70 = sphi 0, %s54
      %s92 = sphi 0, %s94
      %s95 = sphi 0, %s92
      %s96 = sphi 0, %s95
      %s112 = sphi 0, %s96
      %s134 = sphi 0, %s136
      %s137 = sphi 0, %s134
      %s138 = sphi 0, %s137
      %s154 = sphi 0, %s138
      %s176 = sphi 0, %s178
      %s179 = sphi 0, %s176
      %s180 = sphi 0, %s179
      %s196 = sphi 0, %s180
      %s200 = sphi 0, %s200
      %s202 = sphi 0, %s200
      %s203 = sphi 0, %s202
      %s217 = sphi 0, %s203
      %s225 = sphi 0, %s227
      %s228 = sphi 0, %s225
      %s229 = sphi 0, %s228
      %s245 = sphi 0, %s229
    $region4: #{forward.1} parent=1 // loop_header_branch
      %15 = sbr.rel (%p13) target = $region8
    $region5: #{forward.1} parent=1 // loop_body
      %s17 = ssub.s32 %s12, 1
      %s18 = ssub.s32 %s12, 2
      %s25 = sadd.s32 1, %s20
      %p26 = scmp.ge.s32.totalorder %s25, 2
      %s27 = scalar_select %p26, 0, %s25
      %s28 = sadd.s32 1, %s19
      %s29 = scalar_select %p26, %s28, %s19
      %p30 = scmp.ge.s32.totalorder %s29, 1
      %s31 = scalar_select %p30, 0, %s29
      %s32 = sadd.s32 %s20, 1
      %s33 = smul.u32 %s32, 2
      %s34 = ssub.s32 1, %s33
      %p35 = scmp.gt.s32.totalorder %s34, 0
      %s36 = scalar_select %p35, %s34, 0
      %p37 = scmp.lt.s32.totalorder %s36, 1
      %s38 = scalar_select %p37, %s36, 1
      %s39 = sadd.s32 %s27, 1
      %s40 = smul.u32 %s39, 2
      %s41 = ssub.s32 1, %s40
      %p42 = scmp.gt.s32.totalorder %s41, 0
      %s43 = scalar_select %p42, %s41, 0
      %p44 = scmp.lt.s32.totalorder %s43, 1
      %s45 = scalar_select %p44, %s43, 1
      %s46 = ssub.s32 %s19, %s31
      %s47 = ssub.s32 %s38, %s45
      %s48 = sor.u32 %s46, %s47
      %p49 = scmp.eq.s32.totalorder %s48, 0
      %s51 = sadd.s32 %s50, 1
      %s52 = scalar_select %p49, %s50, %s51
      %p55 = pneg %p49
      %p56 = scmp.eq.s32.totalorder %s12, 1
      %p57 = por %p55, %p56
      %p58 = scmp.ne.s32.totalorder %s50, %s53
      %p59 = scmp.eq.s32.totalorder %s12, 0
      %p60 = por %p58, %p59
      %p61 = scmp.ne.s32.totalorder %s50, %s53
      %p62 = scmp.eq.s32.totalorder %s17, 1
      %p63 = por %p61, %p62
      %p64 = scmp.ne.s32.totalorder %s53, %s54
      %p65 = scmp.eq.s32.totalorder %s17, 0
      %p66 = por %p64, %p65
      %p67 = scmp.ne.s32.totalorder %s53, %s54
      %p68 = scmp.eq.s32.totalorder %s18, 1
      %p69 = por %p67, %p68
      %p71 = scmp.ne.s32.totalorder %s54, %s70
      %p72 = scmp.eq.s32.totalorder %s18, 0
      %p73 = por %p71, %p72
      %s74 = sadd.s32 %s20, 1
      %s75 = smul.u32 %s74, 2
      %s76 = ssub.s32 2, %s75
      %p77 = scmp.gt.s32.totalorder %s76, 0
      %s78 = scalar_select %p77, %s76, 0
      %p79 = scmp.lt.s32.totalorder %s78, 1
      %s80 = scalar_select %p79, %s78, 1
      %s81 = sadd.s32 %s27, 1
      %s82 = smul.u32 %s81, 2
      %s83 = ssub.s32 2, %s82
      %p84 = scmp.gt.s32.totalorder %s83, 0
      %s85 = scalar_select %p84, %s83, 0
      %p86 = scmp.lt.s32.totalorder %s85, 1
      %s87 = scalar_select %p86, %s85, 1
      %s88 = ssub.s32 %s19, %s31
      %s89 = ssub.s32 %s80, %s87
      %s90 = sor.u32 %s88, %s89
      %p91 = scmp.eq.s32.totalorder %s90, 0
      %s93 = sadd.s32 %s92, 1
      %s94 = scalar_select %p91, %s92, %s93
      %p97 = pneg %p91
      %p98 = scmp.eq.s32.totalorder %s12, 1
      %p99 = por %p97, %p98
      %p100 = scmp.ne.s32.totalorder %s92, %s95
      %p101 = scmp.eq.s32.totalorder %s12, 0
      %p102 = por %p100, %p101
      %p103 = scmp.ne.s32.totalorder %s92, %s95
      %p104 = scmp.eq.s32.totalorder %s17, 1
      %p105 = por %p103, %p104
      %p106 = scmp.ne.s32.totalorder %s95, %s96
      %p107 = scmp.eq.s32.totalorder %s17, 0
      %p108 = por %p106, %p107
      %p109 = scmp.ne.s32.totalorder %s95, %s96
      %p110 = scmp.eq.s32.totalorder %s18, 1
      %p111 = por %p109, %p110
      %p113 = scmp.ne.s32.totalorder %s96, %s112
      %p114 = scmp.eq.s32.totalorder %s18, 0
      %p115 = por %p113, %p114
      %s116 = sadd.s32 %s20, 1
      %s117 = smul.u32 %s116, 2
      %s118 = ssub.s32 3, %s117
      %p119 = scmp.gt.s32.totalorder %s118, 0
      %s120 = scalar_select %p119, %s118, 0
      %p121 = scmp.lt.s32.totalorder %s120, 1
      %s122 = scalar_select %p121, %s120, 1
      %s123 = sadd.s32 %s27, 1
      %s124 = smul.u32 %s123, 2
      %s125 = ssub.s32 3, %s124
      %p126 = scmp.gt.s32.totalorder %s125, 0
      %s127 = scalar_select %p126, %s125, 0
      %p128 = scmp.lt.s32.totalorder %s127, 1
      %s129 = scalar_select %p128, %s127, 1
      %s130 = ssub.s32 %s19, %s31
      %s131 = ssub.s32 %s122, %s129
      %s132 = sor.u32 %s130, %s131
      %p133 = scmp.eq.s32.totalorder %s132, 0
      %s135 = sadd.s32 %s134, 1
      %s136 = scalar_select %p133, %s134, %s135
      %p139 = pneg %p133
      %p140 = scmp.eq.s32.totalorder %s12, 1
      %p141 = por %p139, %p140
      %p142 = scmp.ne.s32.totalorder %s134, %s137
      %p143 = scmp.eq.s32.totalorder %s12, 0
      %p144 = por %p142, %p143
      %p145 = scmp.ne.s32.totalorder %s134, %s137
      %p146 = scmp.eq.s32.totalorder %s17, 1
      %p147 = por %p145, %p146
      %p148 = scmp.ne.s32.totalorder %s137, %s138
      %p149 = scmp.eq.s32.totalorder %s17, 0
      %p150 = por %p148, %p149
      %p151 = scmp.ne.s32.totalorder %s137, %s138
      %p152 = scmp.eq.s32.totalorder %s18, 1
      %p153 = por %p151, %p152
      %p155 = scmp.ne.s32.totalorder %s138, %s154
      %p156 = scmp.eq.s32.totalorder %s18, 0
      %p157 = por %p155, %p156
      %s158 = sadd.s32 %s20, 1
      %s159 = smul.u32 %s158, 2
      %s160 = ssub.s32 4, %s159
      %p161 = scmp.gt.s32.totalorder %s160, 0
      %s162 = scalar_select %p161, %s160, 0
      %p163 = scmp.lt.s32.totalorder %s162, 1
      %s164 = scalar_select %p163, %s162, 1
      %s165 = sadd.s32 %s27, 1
      %s166 = smul.u32 %s165, 2
      %s167 = ssub.s32 4, %s166
      %p168 = scmp.gt.s32.totalorder %s167, 0
      %s169 = scalar_select %p168, %s167, 0
      %p170 = scmp.lt.s32.totalorder %s169, 1
      %s171 = scalar_select %p170, %s169, 1
      %s172 = ssub.s32 %s19, %s31
      %s173 = ssub.s32 %s164, %s171
      %s174 = sor.u32 %s172, %s173
      %p175 = scmp.eq.s32.totalorder %s174, 0
      %s177 = sadd.s32 %s176, 1
      %s178 = scalar_select %p175, %s176, %s177
      %p181 = pneg %p175
      %p182 = scmp.eq.s32.totalorder %s12, 1
      %p183 = por %p181, %p182
      %p184 = scmp.ne.s32.totalorder %s176, %s179
      %p185 = scmp.eq.s32.totalorder %s12, 0
      %p186 = por %p184, %p185
      %p187 = scmp.ne.s32.totalorder %s176, %s179
      %p188 = scmp.eq.s32.totalorder %s17, 1
      %p189 = por %p187, %p188
      %p190 = scmp.ne.s32.totalorder %s179, %s180
      %p191 = scmp.eq.s32.totalorder %s17, 0
      %p192 = por %p190, %p191
      %p193 = scmp.ne.s32.totalorder %s179, %s180
      %p194 = scmp.eq.s32.totalorder %s18, 1
      %p195 = por %p193, %p194
      %p197 = scmp.ne.s32.totalorder %s180, %s196
      %p198 = scmp.eq.s32.totalorder %s18, 0
      %p199 = por %p197, %p198
      %s201 = sadd.s32 %s200, 1
      %p204 = scmp.eq.s32.totalorder %s12, 1
      %p205 = scmp.ne.s32.totalorder %s200, %s202
      %p206 = scmp.eq.s32.totalorder %s12, 0
      %p207 = por %p205, %p206
      %p208 = scmp.ne.s32.totalorder %s200, %s202
      %p209 = scmp.eq.s32.totalorder %s17, 1
      %p210 = por %p208, %p209
      %p211 = scmp.ne.s32.totalorder %s202, %s203
      %p212 = scmp.eq.s32.totalorder %s17, 0
      %p213 = por %p211, %p212
      %p214 = scmp.ne.s32.totalorder %s202, %s203
      %p215 = scmp.eq.s32.totalorder %s18, 1
      %p216 = por %p214, %p215
      %p218 = scmp.ne.s32.totalorder %s203, %s217
      %p219 = scmp.eq.s32.totalorder %s18, 0
      %p220 = por %p218, %p219
      %s221 = ssub.s32 %s19, %s31
      %s222 = ssub.s32 %s20, %s27
      %s223 = sor.u32 %s221, %s222
      %p224 = scmp.eq.s32.totalorder %s223, 0
      %s226 = sadd.s32 %s225, 1
      %s227 = scalar_select %p224, %s225, %s226
      %p230 = pneg %p224
      %p231 = scmp.eq.s32.totalorder %s12, 1
      %p232 = por %p230, %p231
      %p233 = scmp.ne.s32.totalorder %s225, %s228
      %p234 = scmp.eq.s32.totalorder %s12, 0
      %p235 = por %p233, %p234
      %p236 = scmp.ne.s32.totalorder %s225, %s228
      %p237 = scmp.eq.s32.totalorder %s17, 1
      %p238 = por %p236, %p237
      %p239 = scmp.ne.s32.totalorder %s228, %s229
      %p240 = scmp.eq.s32.totalorder %s17, 0
      %p241 = por %p239, %p240
      %p242 = scmp.ne.s32.totalorder %s228, %s229
      %p243 = scmp.eq.s32.totalorder %s18, 1
      %p244 = por %p242, %p243
      %p246 = scmp.ne.s32.totalorder %s229, %s245
      %p247 = scmp.eq.s32.totalorder %s18, 0
      %p248 = por %p246, %p247
      %p249 = scmp.le.s32.totalorder 1, %s12
      %p250 = scmp.lt.s32.totalorder %s12, 3
      %p251 = pnand %p249, %p250
      %p252 = pneg %p251
      // Predicated region
      $region9: #{forward.1} parent=5 // pred_check
        _
      $region10: #{forward.1} parent=5 // pred_check_branch
        %254 = sbr.rel (%p251) target = $region12
      $region11: #{forward.1} parent=5 // pred_region
        %s255 = ssub.s32 %s12, 1
        // Predicated region
        $region13: #{forward.1} parent=11 // pred_check
          %p256 = pneg %p213
        $region14: #{forward.1} parent=11 // pred_check_branch
          %258 = sbr.rel (%p256) target = $region16
        $region15: #{forward.1} parent=11 // pred_region
          %260 = vsyncadd [#allocation3], 0
          %s261 = sshll.u32 %s4, 4
          %s262 = int_to_ptr.hbm [resolvable:$true] %s261
          %s263 = sshll.u32 [#allocation2], 4
          %s264 = int_to_ptr.vmem [resolvable:$true] %s263
          %269 = dma.hbm_to_vmem [thread:$0]  %s262, 3072, %s264, [#allocation3], 64, 64, 4
        $region16: #{forward.1} parent=11 // pred_fallthru
          _
      $region12: #{forward.1} parent=5 // pred_fallthru
        _
      %p270 = scmp.lt.s32.totalorder %s12, 2
      // Predicated region
      $region17: #{forward.1} parent=5 // pred_check
        %p271 = pneg %p270
      $region18: #{forward.1} parent=5 // pred_check_branch
        %273 = sbr.rel (%p271) target = $region20
      $region19: #{forward.1} parent=5 // pred_region
        // Predicated region
        $region21: #{forward.1} parent=19 // pred_check
          %p274 = pneg %p60
        $region22: #{forward.1} parent=19 // pred_check_branch
          %276 = sbr.rel (%p274) target = $region24
        $region23: #{forward.1} parent=19 // pred_region
          %s277 = sadd.s32 %s20, 1
          %s278 = smul.u32 %s277, 2
          %s279 = ssub.s32 1, %s278
          %p280 = scmp.gt.s32.totalorder %s279, 0
          %s281 = scalar_select %p280, %s279, 0
          %p282 = scmp.lt.s32.totalorder %s281, 1
          %s283 = scalar_select %p282, %s281, 1
          %p284 = scmp.lt.s32.totalorder %s19, 0
          %s285 = scalar_select %p284, %s19, 0
          %p286 = scmp.lt.s32.totalorder %s283, 1
          %s287 = scalar_select %p286, %s283, 1
          %s288 = smul.addr %s285, 2
          %s289 = sadd.s32 %s287, %s288
          %s290 = smul.addr %s289, 2
          %s291 = scalar_lea.vmem %s0, %s290
          %s292 = sadd.s32 %s20, 1
          %s293 = smul.u32 %s292, 2
          %s294 = ssub.s32 1, %s293
          %p295 = scmp.gt.s32.totalorder %s294, 0
          %s296 = scalar_select %p295, %s294, 0
          %p297 = scmp.lt.s32.totalorder %s296, 1
          %s298 = scalar_select %p297, %s296, 1
        $region24: #{forward.1} parent=19 // pred_fallthru
          _
        // Predicated region
        $region25: #{forward.1} parent=19 // pred_check
          %p299 = pneg %p102
        $region26: #{forward.1} parent=19 // pred_check_branch
          %301 = sbr.rel (%p299) target = $region28
        $region27: #{forward.1} parent=19 // pred_region
          %s302 = sadd.s32 %s20, 1
          %s303 = smul.u32 %s302, 2
          %s304 = ssub.s32 2, %s303
          %p305 = scmp.gt.s32.totalorder %s304, 0
          %s306 = scalar_select %p305, %s304, 0
          %p307 = scmp.lt.s32.totalorder %s306, 1
          %s308 = scalar_select %p307, %s306, 1
          %p309 = scmp.lt.s32.totalorder %s19, 0
          %s310 = scalar_select %p309, %s19, 0
          %p311 = scmp.lt.s32.totalorder %s308, 1
          %s312 = scalar_select %p311, %s308, 1
          %s313 = smul.addr %s310, 2
          %s314 = sadd.s32 %s312, %s313
          %s315 = smul.addr %s314, 2
          %s316 = scalar_lea.vmem %s1, %s315
          %s317 = sadd.s32 %s20, 1
          %s318 = smul.u32 %s317, 2
          %s319 = ssub.s32 2, %s318
          %p320 = scmp.gt.s32.totalorder %s319, 0
          %s321 = scalar_select %p320, %s319, 0
          %p322 = scmp.lt.s32.totalorder %s321, 1
          %s323 = scalar_select %p322, %s321, 1
        $region28: #{forward.1} parent=19 // pred_fallthru
          _
        // Predicated region
        $region29: #{forward.1} parent=19 // pred_check
          %p324 = pneg %p144
        $region30: #{forward.1} parent=19 // pred_check_branch
          %326 = sbr.rel (%p324) target = $region32
        $region31: #{forward.1} parent=19 // pred_region
          %s327 = sadd.s32 %s20, 1
          %s328 = smul.u32 %s327, 2
          %s329 = ssub.s32 3, %s328
          %p330 = scmp.gt.s32.totalorder %s329, 0
          %s331 = scalar_select %p330, %s329, 0
          %p332 = scmp.lt.s32.totalorder %s331, 1
          %s333 = scalar_select %p332, %s331, 1
          %p334 = scmp.lt.s32.totalorder %s19, 0
          %s335 = scalar_select %p334, %s19, 0
          %p336 = scmp.lt.s32.totalorder %s333, 1
          %s337 = scalar_select %p336, %s333, 1
          %s338 = smul.addr %s335, 2
          %s339 = sadd.s32 %s337, %s338
          %s340 = smul.addr %s339, 2
          %s341 = scalar_lea.vmem %s2, %s340
          %s342 = sadd.s32 %s20, 1
          %s343 = smul.u32 %s342, 2
          %s344 = ssub.s32 3, %s343
          %p345 = scmp.gt.s32.totalorder %s344, 0
          %s346 = scalar_select %p345, %s344, 0
          %p347 = scmp.lt.s32.totalorder %s346, 1
          %s348 = scalar_select %p347, %s346, 1
        $region32: #{forward.1} parent=19 // pred_fallthru
          _
        // Predicated region
        $region33: #{forward.1} parent=19 // pred_check
          %p349 = pneg %p186
        $region34: #{forward.1} parent=19 // pred_check_branch
          %351 = sbr.rel (%p349) target = $region36
        $region35: #{forward.1} parent=19 // pred_region
          %s352 = sadd.s32 %s20, 1
          %s353 = smul.u32 %s352, 2
          %s354 = ssub.s32 4, %s353
          %p355 = scmp.gt.s32.totalorder %s354, 0
          %s356 = scalar_select %p355, %s354, 0
          %p357 = scmp.lt.s32.totalorder %s356, 1
          %s358 = scalar_select %p357, %s356, 1
          %p359 = scmp.lt.s32.totalorder %s19, 0
          %s360 = scalar_select %p359, %s19, 0
          %p361 = scmp.lt.s32.totalorder %s358, 1
          %s362 = scalar_select %p361, %s358, 1
          %s363 = smul.addr %s360, 2
          %s364 = sadd.s32 %s362, %s363
          %s365 = smul.addr %s364, 2
          %s366 = scalar_lea.vmem %s3, %s365
          %s367 = sadd.s32 %s20, 1
          %s368 = smul.u32 %s367, 2
          %s369 = ssub.s32 4, %s368
          %p370 = scmp.gt.s32.totalorder %s369, 0
          %s371 = scalar_select %p370, %s369, 0
          %p372 = scmp.lt.s32.totalorder %s371, 1
          %s373 = scalar_select %p372, %s371, 1
        $region36: #{forward.1} parent=19 // pred_fallthru
          _
      $region20: #{forward.1} parent=5 // pred_fallthru
        _
      %p374 = scmp.le.s32.totalorder 1, %s12
      %p375 = scmp.lt.s32.totalorder %s12, 3
      %p376 = pnand %p374, %p375
      %p377 = pneg %p376
      // Predicated region
      $region37: #{forward.1} parent=5 // pred_check
        _
      $region38: #{forward.1} parent=5 // pred_check_branch
        %379 = sbr.rel (%p376) target = $region40
      $region39: #{forward.1} parent=5 // pred_region
        %s380 = ssub.s32 %s12, 1
        // Predicated region
        $region41: #{forward.1} parent=39 // pred_check
          %p381 = pneg %p213
        $region42: #{forward.1} parent=39 // pred_check_branch
          %383 = sbr.rel (%p381) target = $region44
        $region43: #{forward.1} parent=39 // pred_region
          %385 = dma.done [#allocation3], 3072
        $region44: #{forward.1} parent=39 // pred_fallthru
          _
        %s386 = sadd.s32 %s22, 1
        %s387 = smul.u32 %s386, 2
        %s388 = ssub.s32 1, %s387
        %p389 = scmp.gt.s32.totalorder %s388, 0
        %s390 = scalar_select %p389, %s388, 0
        %p391 = scmp.lt.s32.totalorder %s390, 1
        %s392 = scalar_select %p391, %s390, 1
        %p393 = scmp.lt.s32.totalorder %s21, 0
        %s394 = scalar_select %p393, %s21, 0
        %p395 = scmp.lt.s32.totalorder %s392, 1
        %s396 = scalar_select %p395, %s392, 1
        %s397 = smul.addr %s394, 2
        %s398 = sadd.s32 %s396, %s397
        %s399 = smul.addr %s398, 2
        %s400 = scalar_lea.vmem %s0, %s399
        %p401 = pneg %p66
        %p402 = pneg %p63
        %s403 = sadd.s32 %s22, 1
        %s404 = smul.u32 %s403, 2
        %s405 = ssub.s32 2, %s404
        %p406 = scmp.gt.s32.totalorder %s405, 0
        %s407 = scalar_select %p406, %s405, 0
        %p408 = scmp.lt.s32.totalorder %s407, 1
        %s409 = scalar_select %p408, %s407, 1
        %p410 = scmp.lt.s32.totalorder %s21, 0
        %s411 = scalar_select %p410, %s21, 0
        %p412 = scmp.lt.s32.totalorder %s409, 1
        %s413 = scalar_select %p412, %s409, 1
        %s414 = smul.addr %s411, 2
        %s415 = sadd.s32 %s413, %s414
        %s416 = smul.addr %s415, 2
        %s417 = scalar_lea.vmem %s1, %s416
        %p418 = pneg %p108
        %p419 = pneg %p105
        %s420 = sadd.s32 %s22, 1
        %s421 = smul.u32 %s420, 2
        %s422 = ssub.s32 3, %s421
        %p423 = scmp.gt.s32.totalorder %s422, 0
        %s424 = scalar_select %p423, %s422, 0
        %p425 = scmp.lt.s32.totalorder %s424, 1
        %s426 = scalar_select %p425, %s424, 1
        %p427 = scmp.lt.s32.totalorder %s21, 0
        %s428 = scalar_select %p427, %s21, 0
        %p429 = scmp.lt.s32.totalorder %s426, 1
        %s430 = scalar_select %p429, %s426, 1
        %s431 = smul.addr %s428, 2
        %s432 = sadd.s32 %s430, %s431
        %s433 = smul.addr %s432, 2
        %s434 = scalar_lea.vmem %s2, %s433
        %p435 = pneg %p150
        %p436 = pneg %p147
        %s437 = sadd.s32 %s22, 1
        %s438 = smul.u32 %s437, 2
        %s439 = ssub.s32 4, %s438
        %p440 = scmp.gt.s32.totalorder %s439, 0
        %s441 = scalar_select %p440, %s439, 0
        %p442 = scmp.lt.s32.totalorder %s441, 1
        %s443 = scalar_select %p442, %s441, 1
        %p444 = scmp.lt.s32.totalorder %s21, 0
        %s445 = scalar_select %p444, %s21, 0
        %p446 = scmp.lt.s32.totalorder %s443, 1
        %s447 = scalar_select %p446, %s443, 1
        %s448 = smul.addr %s445, 2
        %s449 = sadd.s32 %s447, %s448
        %s450 = smul.addr %s449, 2
        %s451 = scalar_lea.vmem %s3, %s450
        %p452 = pneg %p192
        %p453 = pneg %p189
        %p454 = pneg %p213
        %p455 = pneg %p210
        %p456 = pneg %p241
        %p457 = pneg %p238
        %s458 = sand.u32 %s228, 1
        %s459 = sand.u32 %s228, 1
        %s460 = smul.addr %s459, 4
        %s461 = scalar_lea.vmem [#allocation4], %s460
        %s462 = sadd.s32 %s22, 1
        %s463 = smul.u32 %s462, 2
        %s464 = ssub.s32 1, %s463
        %p465 = scmp.gt.s32.totalorder %s464, 0
        %s466 = scalar_select %p465, %s464, 0
        %p467 = scmp.lt.s32.totalorder %s466, 1
        %s468 = scalar_select %p467, %s466, 1
        %p469 = scmp.lt.s32.totalorder %s21, 0
        %s470 = scalar_select %p469, %s21, 0
        %p471 = scmp.lt.s32.totalorder %s468, 1
        %s472 = scalar_select %p471, %s468, 1
        %s473 = smul.addr %s470, 2
        %s474 = sadd.s32 %s472, %s473
        %s475 = smul.addr %s474, 2
        %s476 = scalar_lea.vmem %s0, %s475
        %s477 = sadd.s32 %s22, 1
        %s478 = smul.u32 %s477, 2
        %s479 = ssub.s32 1, %s478
        %p480 = scmp.gt.s32.totalorder %s479, 0
        %s481 = scalar_select %p480, %s479, 0
        %p482 = scmp.lt.s32.totalorder %s481, 1
        %s483 = scalar_select %p482, %s481, 1
        %s484 = sadd.s32 %s22, 1
        %s485 = smul.u32 %s484, 2
        %s486 = ssub.s32 2, %s485
        %p487 = scmp.gt.s32.totalorder %s486, 0
        %s488 = scalar_select %p487, %s486, 0
        %p489 = scmp.lt.s32.totalorder %s488, 1
        %s490 = scalar_select %p489, %s488, 1
        %p491 = scmp.lt.s32.totalorder %s21, 0
        %s492 = scalar_select %p491, %s21, 0
        %p493 = scmp.lt.s32.totalorder %s490, 1
        %s494 = scalar_select %p493, %s490, 1
        %s495 = smul.addr %s492, 2
        %s496 = sadd.s32 %s494, %s495
        %s497 = smul.addr %s496, 2
        %s498 = scalar_lea.vmem %s1, %s497
        %s499 = sadd.s32 %s22, 1
        %s500 = smul.u32 %s499, 2
        %s501 = ssub.s32 2, %s500
        %p502 = scmp.gt.s32.totalorder %s501, 0
        %s503 = scalar_select %p502, %s501, 0
        %p504 = scmp.lt.s32.totalorder %s503, 1
        %s505 = scalar_select %p504, %s503, 1
        %s506 = sadd.s32 %s22, 1
        %s507 = smul.u32 %s506, 2
        %s508 = ssub.s32 3, %s507
        %p509 = scmp.gt.s32.totalorder %s508, 0
        %s510 = scalar_select %p509, %s508, 0
        %p511 = scmp.lt.s32.totalorder %s510, 1
        %s512 = scalar_select %p511, %s510, 1
        %p513 = scmp.lt.s32.totalorder %s21, 0
        %s514 = scalar_select %p513, %s21, 0
        %p515 = scmp.lt.s32.totalorder %s512, 1
        %s516 = scalar_select %p515, %s512, 1
        %s517 = smul.addr %s514, 2
        %s518 = sadd.s32 %s516, %s517
        %s519 = smul.addr %s518, 2
        %s520 = scalar_lea.vmem %s2, %s519
        %s521 = sadd.s32 %s22, 1
        %s522 = smul.u32 %s521, 2
        %s523 = ssub.s32 3, %s522
        %p524 = scmp.gt.s32.totalorder %s523, 0
        %s525 = scalar_select %p524, %s523, 0
        %p526 = scmp.lt.s32.totalorder %s525, 1
        %s527 = scalar_select %p526, %s525, 1
        %s528 = sadd.s32 %s22, 1
        %s529 = smul.u32 %s528, 2
        %s530 = ssub.s32 4, %s529
        %p531 = scmp.gt.s32.totalorder %s530, 0
        %s532 = scalar_select %p531, %s530, 0
        %p533 = scmp.lt.s32.totalorder %s532, 1
        %s534 = scalar_select %p533, %s532, 1
        %p535 = scmp.lt.s32.totalorder %s21, 0
        %s536 = scalar_select %p535, %s21, 0
        %p537 = scmp.lt.s32.totalorder %s534, 1
        %s538 = scalar_select %p537, %s534, 1
        %s539 = smul.addr %s536, 2
        %s540 = sadd.s32 %s538, %s539
        %s541 = smul.addr %s540, 2
        %s542 = scalar_lea.vmem %s3, %s541
        %s543 = sadd.s32 %s22, 1
        %s544 = smul.u32 %s543, 2
        %s545 = ssub.s32 4, %s544
        %p546 = scmp.gt.s32.totalorder %s545, 0
        %s547 = scalar_select %p546, %s545, 0
        %p548 = scmp.lt.s32.totalorder %s547, 1
        %s549 = scalar_select %p548, %s547, 1
        %s550 = smul.u32 2, %s22
        %s551 = ssub.s32 3, %s550
        %p552 = scmp.lt.s32.totalorder %s551, 2
        %s553 = scalar_select %p552, %s551, 2
        %s554 = smul.u32 2, %s553
        %s555 = sadd.s32 %s22, 1
        %s556 = smul.u32 %s555, 2
        %s557 = ssub.s32 1, %s556
        %v558 = vlaneseq
        %v559 = vand.u32 %v558, 127
        %v560 = vld [vmem:[%s476] sm:$0x3]
        %p561 = scmp.ge.s32.totalorder %s557, 0
        %p562 = scmp.lt.s32.totalorder %s557, 2
        %p563 = pnand %p561, %p562
        %p564 = pneg %p563
        %p565 = scmp.ne.s32.totalorder %s557, 1
        %vm566 = vcmp.lt.s32.totalorder %v559, 122
        %s567 = scalar_select %p565, 1, 0
        %v568 = vstv %s567
        %vm569 = vcmp.eq.s32.totalorder %v568, 1
        %vm570 = vmor %vm569, %vm566
        %s571 = scalar_select %p564, 1, 0
        %v572 = vstv %s571
        %vm573 = vcmp.eq.s32.totalorder %v572, 1
        %vm574 = vmand %vm573, %vm570
        %v575 = vsel %vm574, %v560, 0.0
        %v576 = vpack.c.bf16 %v575, %v575
        %s577 = ssub.s32 2, %s556
        %v578 = vld [vmem:[%s498] sm:$0x3]
        %p579 = scmp.ge.s32.totalorder %s577, 0
        %p580 = scmp.lt.s32.totalorder %s577, 2
        %p581 = pnand %p579, %p580
        %p582 = pneg %p581
        %p583 = scmp.ne.s32.totalorder %s577, 1
        %s584 = scalar_select %p583, 1, 0
        %v585 = vstv %s584
        %vm586 = vcmp.eq.s32.totalorder %v585, 1
        %vm587 = vmor %vm586, %vm566
        %s588 = scalar_select %p582, 1, 0
        %v589 = vstv %s588
        %vm590 = vcmp.eq.s32.totalorder %v589, 1
        %vm591 = vmand %vm590, %vm587
        %v592 = vsel %vm591, %v578, 0.0
        %v593 = vpack.c.bf16 %v592, %v592
        %s594 = ssub.s32 3, %s556
        %v595 = vld [vmem:[%s520] sm:$0x3]
        %p596 = scmp.ge.s32.totalorder %s594, 0
        %p597 = scmp.lt.s32.totalorder %s594, 2
        %p598 = pnand %p596, %p597
        %p599 = pneg %p598
        %p600 = scmp.ne.s32.totalorder %s594, 1
        %s601 = scalar_select %p600, 1, 0
        %v602 = vstv %s601
        %vm603 = vcmp.eq.s32.totalorder %v602, 1
        %vm604 = vmor %vm603, %vm566
        %s605 = scalar_select %p599, 1, 0
        %v606 = vstv %s605
        %vm607 = vcmp.eq.s32.totalorder %v606, 1
        %vm608 = vmand %vm607, %vm604
        %v609 = vsel %vm608, %v595, 0.0
        %v610 = vpack.c.bf16 %v609, %v609
        %s611 = ssub.s32 4, %s556
        %v612 = vld [vmem:[%s542] sm:$0x3]
        %p613 = scmp.ge.s32.totalorder %s611, 0
        %p614 = scmp.lt.s32.totalorder %s611, 2
        %p615 = pnand %p613, %p614
        %p616 = pneg %p615
        %p617 = scmp.ne.s32.totalorder %s611, 1
        %s618 = scalar_select %p617, 1, 0
        %v619 = vstv %s618
        %vm620 = vcmp.eq.s32.totalorder %v619, 1
        %vm621 = vmor %vm620, %vm566
        %s622 = scalar_select %p616, 1, 0
        %v623 = vstv %s622
        %vm624 = vcmp.eq.s32.totalorder %v623, 1
        %vm625 = vmand %vm624, %vm621
        %v626 = vsel %vm625, %v612, 0.0
        %v627 = vpack.c.bf16 %v626, %v626
        %v628 = vld [vmem:[#allocation2] sm:$0xf]
        %v629 = vld [vmem:[#allocation2 + $0x4] sm:$0xf]
        %v630 = vld [vmem:[#allocation2 + $0x8] sm:$0xf]
        %v631 = vld [vmem:[#allocation2 + $0xc] sm:$0xf]
        %v632 = vld [vmem:[#allocation2 + $0x10] sm:$0xf]
        %v633 = vld [vmem:[#allocation2 + $0x14] sm:$0xf]
        %v634 = vld [vmem:[#allocation2 + $0x18] sm:$0xf]
        %v635 = vld [vmem:[#allocation2 + $0x1c] sm:$0xf]
        %v636 = vld [vmem:[#allocation2 + $0x20] sm:$0xf]
        %v637 = vld [vmem:[#allocation2 + $0x24] sm:$0xf]
        %v638 = vld [vmem:[#allocation2 + $0x28] sm:$0xf]
        %v639 = vld [vmem:[#allocation2 + $0x2c] sm:$0xf]
        %v640 = vld [vmem:[#allocation2 + $0x30] sm:$0xf]
        %v641 = vld [vmem:[#allocation2 + $0x34] sm:$0xf]
        %v642 = vld [vmem:[#allocation2 + $0x38] sm:$0xf]
        %v643 = vld [vmem:[#allocation2 + $0x3c] sm:$0xf]
        %v644 = vld [vmem:[#allocation2 + $0x40] sm:$0xf]
        %v645 = vld [vmem:[#allocation2 + $0x44] sm:$0xf]
        %v646 = vld [vmem:[#allocation2 + $0x48] sm:$0xf]
        %v647 = vld [vmem:[#allocation2 + $0x4c] sm:$0xf]
        %v648 = vld [vmem:[#allocation2 + $0x50] sm:$0xf]
        %v649 = vld [vmem:[#allocation2 + $0x54] sm:$0xf]
        %v650 = vld [vmem:[#allocation2 + $0x58] sm:$0xf]
        %v651 = vld [vmem:[#allocation2 + $0x5c] sm:$0xf]
        %v652 = vld [vmem:[#allocation2 + $0x60] sm:$0xf]
        %v653 = vld [vmem:[#allocation2 + $0x64] sm:$0xf]
        %v654 = vld [vmem:[#allocation2 + $0x68] sm:$0xf]
        %v655 = vld [vmem:[#allocation2 + $0x6c] sm:$0xf]
        %v656 = vld [vmem:[#allocation2 + $0x70] sm:$0xf]
        %v657 = vld [vmem:[#allocation2 + $0x74] sm:$0xf]
        %v658 = vld [vmem:[#allocation2 + $0x78] sm:$0xf]
        %v659 = vld [vmem:[#allocation2 + $0x7c] sm:$0xf]
        %v676 = vunpack.c.l.b16 %v644
        %v677 = vunpack.c.l.b16 %v645
        %v678 = vunpack.c.l.b16 %v646
        %v679 = vunpack.c.l.b16 %v647
        %v680 = vunpack.c.l.b16 %v648
        %v681 = vunpack.c.l.b16 %v649
        %v682 = vunpack.c.l.b16 %v650
        %v683 = vunpack.c.l.b16 %v651
        %v684 = vunpack.c.l.b16 %v652
        %v685 = vunpack.c.l.b16 %v653
        %v686 = vunpack.c.l.b16 %v654
        %v687 = vunpack.c.l.b16 %v655
        %v688 = vunpack.c.l.b16 %v656
        %v689 = vunpack.c.l.b16 %v657
        %v690 = vunpack.c.l.b16 %v658
        %v691 = vunpack.c.l.b16 %v659
        %v692 = vpack.c.b16 %v677, %v676
        %v693 = vpack.c.b16 %v679, %v678
        %v694 = vpack.c.b16 %v681, %v680
        %v695 = vpack.c.b16 %v683, %v682
        %v696 = vpack.c.b16 %v685, %v684
        %v697 = vpack.c.b16 %v687, %v686
        %v698 = vpack.c.b16 %v689, %v688
        %v699 = vpack.c.b16 %v691, %v690
        %708 = vmatpush.bf16.msra.mxu0 %v699
        %709 = vmatpush.bf16.msra.mxu0 %v698
        %710 = vmatpush.bf16.msra.mxu0 %v697
        %711 = vmatpush.bf16.msra.mxu0 %v696
        %712 = vmatpush.bf16.msra.mxu0 %v695
        %713 = vmatpush.bf16.msra.mxu0 %v694
        %714 = vmatpush.bf16.msra.mxu0 %v693
        %715 = vmatpush.bf16.msra.mxu0 %v692
        %716 = vmatmul.bf16.gmra.mxu0 %v610
        %v717 = vpop.f32.mrf.mxu0
        %v718 = vadd.f32 0.0, %v717
        %v719 = vpop.f32.mrf.mxu0
        %720 = vdwg.mxu0
        %v737 = vunpack.c.l.b16 %v628
        %v738 = vunpack.c.l.b16 %v629
        %v739 = vunpack.c.l.b16 %v630
        %v740 = vunpack.c.l.b16 %v631
        %v741 = vunpack.c.l.b16 %v632
        %v742 = vunpack.c.l.b16 %v633
        %v743 = vunpack.c.l.b16 %v634
        %v744 = vunpack.c.l.b16 %v635
        %v745 = vunpack.c.l.b16 %v636
        %v746 = vunpack.c.l.b16 %v637
        %v747 = vunpack.c.l.b16 %v638
        %v748 = vunpack.c.l.b16 %v639
        %v749 = vunpack.c.l.b16 %v640
        %v750 = vunpack.c.l.b16 %v641
        %v751 = vunpack.c.l.b16 %v642
        %v752 = vunpack.c.l.b16 %v643
        %v753 = vpack.c.b16 %v738, %v737
        %v754 = vpack.c.b16 %v740, %v739
        %v755 = vpack.c.b16 %v742, %v741
        %v756 = vpack.c.b16 %v744, %v743
        %v757 = vpack.c.b16 %v746, %v745
        %v758 = vpack.c.b16 %v748, %v747
        %v759 = vpack.c.b16 %v750, %v749
        %v760 = vpack.c.b16 %v752, %v751
        %769 = vmatpush.bf16.msra.mxu0 %v760
        %770 = vmatpush.bf16.msra.mxu0 %v759
        %771 = vmatpush.bf16.msra.mxu0 %v758
        %772 = vmatpush.bf16.msra.mxu0 %v757
        %773 = vmatpush.bf16.msra.mxu0 %v756
        %774 = vmatpush.bf16.msra.mxu0 %v755
        %775 = vmatpush.bf16.msra.mxu0 %v754
        %776 = vmatpush.bf16.msra.mxu0 %v753
        %777 = vmatmul.bf16.gmra.mxu0 %v593
        %v778 = vpop.f32.mrf.mxu0
        %v779 = vadd.f32 %v718, %v778
        %v780 = vpop.f32.mrf.mxu0
        %781 = vdwg.mxu0
        %v782 = vld [vmem:[#allocation2 + $0x80] sm:$0xf]
        %v783 = vld [vmem:[#allocation2 + $0x84] sm:$0xf]
        %v784 = vld [vmem:[#allocation2 + $0x88] sm:$0xf]
        %v785 = vld [vmem:[#allocation2 + $0x8c] sm:$0xf]
        %v786 = vld [vmem:[#allocation2 + $0x90] sm:$0xf]
        %v787 = vld [vmem:[#allocation2 + $0x94] sm:$0xf]
        %v788 = vld [vmem:[#allocation2 + $0x98] sm:$0xf]
        %v789 = vld [vmem:[#allocation2 + $0x9c] sm:$0xf]
        %v790 = vld [vmem:[#allocation2 + $0xa0] sm:$0xf]
        %v791 = vld [vmem:[#allocation2 + $0xa4] sm:$0xf]
        %v792 = vld [vmem:[#allocation2 + $0xa8] sm:$0xf]
        %v793 = vld [vmem:[#allocation2 + $0xac] sm:$0xf]
        %v794 = vld [vmem:[#allocation2 + $0xb0] sm:$0xf]
        %v795 = vld [vmem:[#allocation2 + $0xb4] sm:$0xf]
        %v796 = vld [vmem:[#allocation2 + $0xb8] sm:$0xf]
        %v797 = vld [vmem:[#allocation2 + $0xbc] sm:$0xf]
        %v814 = vunpack.c.l.b16 %v782
        %v815 = vunpack.c.l.b16 %v783
        %v816 = vunpack.c.l.b16 %v784
        %v817 = vunpack.c.l.b16 %v785
        %v818 = vunpack.c.l.b16 %v786
        %v819 = vunpack.c.l.b16 %v787
        %v820 = vunpack.c.l.b16 %v788
        %v821 = vunpack.c.l.b16 %v789
        %v822 = vunpack.c.l.b16 %v790
        %v823 = vunpack.c.l.b16 %v791
        %v824 = vunpack.c.l.b16 %v792
        %v825 = vunpack.c.l.b16 %v793
        %v826 = vunpack.c.l.b16 %v794
        %v827 = vunpack.c.l.b16 %v795
        %v828 = vunpack.c.l.b16 %v796
        %v829 = vunpack.c.l.b16 %v797
        %v830 = vpack.c.b16 %v815, %v814
        %v831 = vpack.c.b16 %v817, %v816
        %v832 = vpack.c.b16 %v819, %v818
        %v833 = vpack.c.b16 %v821, %v820
        %v834 = vpack.c.b16 %v823, %v822
        %v835 = vpack.c.b16 %v825, %v824
        %v836 = vpack.c.b16 %v827, %v826
        %v837 = vpack.c.b16 %v829, %v828
        %846 = vmatpush.bf16.msra.mxu0 %v837
        %847 = vmatpush.bf16.msra.mxu0 %v836
        %848 = vmatpush.bf16.msra.mxu0 %v835
        %849 = vmatpush.bf16.msra.mxu0 %v834
        %850 = vmatpush.bf16.msra.mxu0 %v833
        %851 = vmatpush.bf16.msra.mxu0 %v832
        %852 = vmatpush.bf16.msra.mxu0 %v831
        %853 = vmatpush.bf16.msra.mxu0 %v830
        %854 = vmatmul.bf16.gmra.mxu0 %v627
        %v855 = vpop.f32.mrf.mxu0
        %v856 = vadd.f32 0.0, %v855
        %v857 = vpop.f32.mrf.mxu0
        %858 = vdwg.mxu0
        %v859 = vadd.f32 %v779, %v856
        %860 = vst [vmem:[%s461] sm:$0x3] %v859
        %v861 = vld [vmem:[#allocation2] sm:$0xf]
        %v862 = vld [vmem:[#allocation2 + $0x4] sm:$0xf]
        %v863 = vld [vmem:[#allocation2 + $0x8] sm:$0xf]
        %v864 = vld [vmem:[#allocation2 + $0xc] sm:$0xf]
        %v865 = vld [vmem:[#allocation2 + $0x10] sm:$0xf]
        %v866 = vld [vmem:[#allocation2 + $0x14] sm:$0xf]
        %v867 = vld [vmem:[#allocation2 + $0x18] sm:$0xf]
        %v868 = vld [vmem:[#allocation2 + $0x1c] sm:$0xf]
        %v869 = vld [vmem:[#allocation2 + $0x20] sm:$0xf]
        %v870 = vld [vmem:[#allocation2 + $0x24] sm:$0xf]
        %v871 = vld [vmem:[#allocation2 + $0x28] sm:$0xf]
        %v872 = vld [vmem:[#allocation2 + $0x2c] sm:$0xf]
        %v873 = vld [vmem:[#allocation2 + $0x30] sm:$0xf]
        %v874 = vld [vmem:[#allocation2 + $0x34] sm:$0xf]
        %v875 = vld [vmem:[#allocation2 + $0x38] sm:$0xf]
        %v876 = vld [vmem:[#allocation2 + $0x3c] sm:$0xf]
        %v877 = vld [vmem:[#allocation2 + $0x40] sm:$0xf]
        %v878 = vld [vmem:[#allocation2 + $0x44] sm:$0xf]
        %v879 = vld [vmem:[#allocation2 + $0x48] sm:$0xf]
        %v880 = vld [vmem:[#allocation2 + $0x4c] sm:$0xf]
        %v881 = vld [vmem:[#allocation2 + $0x50] sm:$0xf]
        %v882 = vld [vmem:[#allocation2 + $0x54] sm:$0xf]
        %v883 = vld [vmem:[#allocation2 + $0x58] sm:$0xf]
        %v884 = vld [vmem:[#allocation2 + $0x5c] sm:$0xf]
        %v885 = vld [vmem:[#allocation2 + $0x60] sm:$0xf]
        %v886 = vld [vmem:[#allocation2 + $0x64] sm:$0xf]
        %v887 = vld [vmem:[#allocation2 + $0x68] sm:$0xf]
        %v888 = vld [vmem:[#allocation2 + $0x6c] sm:$0xf]
        %v889 = vld [vmem:[#allocation2 + $0x70] sm:$0xf]
        %v890 = vld [vmem:[#allocation2 + $0x74] sm:$0xf]
        %v891 = vld [vmem:[#allocation2 + $0x78] sm:$0xf]
        %v892 = vld [vmem:[#allocation2 + $0x7c] sm:$0xf]
        %v909 = vunpack.c.l.b16 %v877
        %v910 = vunpack.c.l.b16 %v878
        %v911 = vunpack.c.l.b16 %v879
        %v912 = vunpack.c.l.b16 %v880
        %v913 = vunpack.c.l.b16 %v881
        %v914 = vunpack.c.l.b16 %v882
        %v915 = vunpack.c.l.b16 %v883
        %v916 = vunpack.c.l.b16 %v884
        %v917 = vunpack.c.l.b16 %v885
        %v918 = vunpack.c.l.b16 %v886
        %v919 = vunpack.c.l.b16 %v887
        %v920 = vunpack.c.l.b16 %v888
        %v921 = vunpack.c.l.b16 %v889
        %v922 = vunpack.c.l.b16 %v890
        %v923 = vunpack.c.l.b16 %v891
        %v924 = vunpack.c.l.b16 %v892
        %v925 = vpack.c.b16 %v910, %v909
        %v926 = vpack.c.b16 %v912, %v911
        %v927 = vpack.c.b16 %v914, %v913
        %v928 = vpack.c.b16 %v916, %v915
        %v929 = vpack.c.b16 %v918, %v917
        %v930 = vpack.c.b16 %v920, %v919
        %v931 = vpack.c.b16 %v922, %v921
        %v932 = vpack.c.b16 %v924, %v923
        %941 = vmatpush.bf16.msra.mxu0 %v932
        %942 = vmatpush.bf16.msra.mxu0 %v931
        %943 = vmatpush.bf16.msra.mxu0 %v930
        %944 = vmatpush.bf16.msra.mxu0 %v929
        %945 = vmatpush.bf16.msra.mxu0 %v928
        %946 = vmatpush.bf16.msra.mxu0 %v927
        %947 = vmatpush.bf16.msra.mxu0 %v926
        %948 = vmatpush.bf16.msra.mxu0 %v925
        %949 = vmatmul.bf16.gmra.mxu0 %v593
        %v950 = vpop.f32.mrf.mxu0
        %v951 = vadd.f32 0.0, %v950
        %v952 = vpop.f32.mrf.mxu0
        %953 = vdwg.mxu0
        %v970 = vunpack.c.l.b16 %v861
        %v971 = vunpack.c.l.b16 %v862
        %v972 = vunpack.c.l.b16 %v863
        %v973 = vunpack.c.l.b16 %v864
        %v974 = vunpack.c.l.b16 %v865
        %v975 = vunpack.c.l.b16 %v866
        %v976 = vunpack.c.l.b16 %v867
        %v977 = vunpack.c.l.b16 %v868
        %v978 = vunpack.c.l.b16 %v869
        %v979 = vunpack.c.l.b16 %v870
        %v980 = vunpack.c.l.b16 %v871
        %v981 = vunpack.c.l.b16 %v872
        %v982 = vunpack.c.l.b16 %v873
        %v983 = vunpack.c.l.b16 %v874
        %v984 = vunpack.c.l.b16 %v875
        %v985 = vunpack.c.l.b16 %v876
        %v986 = vpack.c.b16 %v971, %v970
        %v987 = vpack.c.b16 %v973, %v972
        %v988 = vpack.c.b16 %v975, %v974
        %v989 = vpack.c.b16 %v977, %v976
        %v990 = vpack.c.b16 %v979, %v978
        %v991 = vpack.c.b16 %v981, %v980
        %v992 = vpack.c.b16 %v983, %v982
        %v993 = vpack.c.b16 %v985, %v984
        %1002 = vmatpush.bf16.msra.mxu0 %v993
        %1003 = vmatpush.bf16.msra.mxu0 %v992
        %1004 = vmatpush.bf16.msra.mxu0 %v991
        %1005 = vmatpush.bf16.msra.mxu0 %v990
        %1006 = vmatpush.bf16.msra.mxu0 %v989
        %1007 = vmatpush.bf16.msra.mxu0 %v988
        %1008 = vmatpush.bf16.msra.mxu0 %v987
        %1009 = vmatpush.bf16.msra.mxu0 %v986
        %1010 = vmatmul.bf16.gmra.mxu0 %v576
        %v1011 = vpop.f32.mrf.mxu0
        %v1012 = vadd.f32 %v951, %v1011
        %v1013 = vpop.f32.mrf.mxu0
        %1014 = vdwg.mxu0
        %v1015 = vld [vmem:[#allocation2 + $0x80] sm:$0xf]
        %v1016 = vld [vmem:[#allocation2 + $0x84] sm:$0xf]
        %v1017 = vld [vmem:[#allocation2 + $0x88] sm:$0xf]
        %v1018 = vld [vmem:[#allocation2 + $0x8c] sm:$0xf]
        %v1019 = vld [vmem:[#allocation2 + $0x90] sm:$0xf]
        %v1020 = vld [vmem:[#allocation2 + $0x94] sm:$0xf]
        %v1021 = vld [vmem:[#allocation2 + $0x98] sm:$0xf]
        %v1022 = vld [vmem:[#allocation2 + $0x9c] sm:$0xf]
        %v1023 = vld [vmem:[#allocation2 + $0xa0] sm:$0xf]
        %v1024 = vld [vmem:[#allocation2 + $0xa4] sm:$0xf]
        %v1025 = vld [vmem:[#allocation2 + $0xa8] sm:$0xf]
        %v1026 = vld [vmem:[#allocation2 + $0xac] sm:$0xf]
        %v1027 = vld [vmem:[#allocation2 + $0xb0] sm:$0xf]
        %v1028 = vld [vmem:[#allocation2 + $0xb4] sm:$0xf]
        %v1029 = vld [vmem:[#allocation2 + $0xb8] sm:$0xf]
        %v1030 = vld [vmem:[#allocation2 + $0xbc] sm:$0xf]
        %v1047 = vunpack.c.l.b16 %v1015
        %v1048 = vunpack.c.l.b16 %v1016
        %v1049 = vunpack.c.l.b16 %v1017
        %v1050 = vunpack.c.l.b16 %v1018
        %v1051 = vunpack.c.l.b16 %v1019
        %v1052 = vunpack.c.l.b16 %v1020
        %v1053 = vunpack.c.l.b16 %v1021
        %v1054 = vunpack.c.l.b16 %v1022
        %v1055 = vunpack.c.l.b16 %v1023
        %v1056 = vunpack.c.l.b16 %v1024
        %v1057 = vunpack.c.l.b16 %v1025
        %v1058 = vunpack.c.l.b16 %v1026
        %v1059 = vunpack.c.l.b16 %v1027
        %v1060 = vunpack.c.l.b16 %v1028
        %v1061 = vunpack.c.l.b16 %v1029
        %v1062 = vunpack.c.l.b16 %v1030
        %v1063 = vpack.c.b16 %v1048, %v1047
        %v1064 = vpack.c.b16 %v1050, %v1049
        %v1065 = vpack.c.b16 %v1052, %v1051
        %v1066 = vpack.c.b16 %v1054, %v1053
        %v1067 = vpack.c.b16 %v1056, %v1055
        %v1068 = vpack.c.b16 %v1058, %v1057
        %v1069 = vpack.c.b16 %v1060, %v1059
        %v1070 = vpack.c.b16 %v1062, %v1061
        %1079 = vmatpush.bf16.msra.mxu0 %v1070
        %1080 = vmatpush.bf16.msra.mxu0 %v1069
        %1081 = vmatpush.bf16.msra.mxu0 %v1068
        %1082 = vmatpush.bf16.msra.mxu0 %v1067
        %1083 = vmatpush.bf16.msra.mxu0 %v1066
        %1084 = vmatpush.bf16.msra.mxu0 %v1065
        %1085 = vmatpush.bf16.msra.mxu0 %v1064
        %1086 = vmatpush.bf16.msra.mxu0 %v1063
        %1087 = vmatmul.bf16.gmra.mxu0 %v610
        %v1088 = vpop.f32.mrf.mxu0
        %v1089 = vadd.f32 0.0, %v1088
        %v1090 = vpop.f32.mrf.mxu0
        %1091 = vdwg.mxu0
        %v1092 = vadd.f32 %v1012, %v1089
        %1093 = vst [vmem:[%s461 + $0x2] sm:$0x3] %v1092
        %s1094 = sand.u32 %s228, 1
        %s1095 = sand.u32 %s228, 1
        %s1096 = smul.addr %s1095, 4
        %s1097 = scalar_lea.vmem [#allocation4], %s1096
        // Predicated region
        $region45: #{forward.1} parent=39 // pred_check
          %p1098 = pneg %p238
        $region46: #{forward.1} parent=39 // pred_check_branch
          %1100 = sbr.rel (%p1098) target = $region48
        $region47: #{forward.1} parent=39 // pred_region
          %s1101 = smul.u32 2, %s22
          %s1102 = ssub.s32 3, %s1101
          %p1103 = scmp.lt.s32.totalorder %s1102, 2
          %s1104 = scalar_select %p1103, %s1102, 2
          %s1105 = smul.u32 2, %s1104
          %p1106 = scmp.ne.s32.totalorder 0, %s1105
          %s1107 = smul.addr %s21, 3
          %s1108 = sadd.s32 %s1101, %s1107
          %s1109 = smul.addr %s1108, 2
          %s1110 = scalar_lea.vmem %s5, %s1109
          %s1111 = smul.u32 %s1104, 2
          // Predicated region
          $region49: #{forward.1} parent=47 // pred_check
            %p1112 = pneg %p1106
          $region50: #{forward.1} parent=47 // pred_check_branch
            %1114 = sbr.rel (%p1112) target = $region52
          $region51: #{forward.1} parent=47 // pred_region
            %p1115 = scmp.lt.u32.totalorder %s1111, 8
            %p1116 = pneg %p1115
            // Predicated region
            $region53: #{forward.1} parent=51 // pred_check
              _
            $region54: #{forward.1} parent=51 // pred_check_branch
              %1118 = sbr.rel (%p1115) target = $region56
            $region55: #{forward.1} parent=51 // pred_region
              %s1134 = sand.u32 %s1111, 7
              %p1135 = scmp.eq.s32.totalorder %s1134, 0
              // Predicated region
              $region68: #{forward.1} parent=55 // pred_check
                %p1136 = pneg %p1135
              $region69: #{forward.1} parent=55 // pred_check_branch
                %1138 = sbr.rel (%p1136) target = $region71
              $region70: #{forward.1} parent=55 // pred_region
                %s1139 = sshrl.u32 %s1111, 3
                %s1140 = sshrl.u32 %s1139, 5
                // While loop
                $region72: #{forward.1} parent=70 // loop_pre_header
                  _
                $region73: #{forward.1} parent=70 // loop_header
                  %s1142 = sphi 0, %s1144
                  %p1143 = scmp.ge.s32.totalorder %s1142, %s1140
                  %s1147 = sphi 0, %s1216
                  %s1148 = sphi %s1097, %s1219
                  %s1149 = sphi %s1110, %s1220
                $region74: #{forward.1} parent=70 // loop_header_branch
                  %1146 = sbr.rel (%p1143) target = $region78
                $region75: #{forward.1} parent=70 // loop_body
                  %v1150 = vld [vmem:[%s1148] sm:$0xff]
                  %1151 = vst [vmem:[%s1149] sm:$0xff] %v1150
                  %v1152 = vld [vmem:[%s1148 + $0x8] sm:$0xff]
                  %1153 = vst [vmem:[%s1149 + $0x8] sm:$0xff] %v1152
                  %v1154 = vld [vmem:[%s1148 + $0x10] sm:$0xff]
                  %1155 = vst [vmem:[%s1149 + $0x10] sm:$0xff] %v1154
                  %v1156 = vld [vmem:[%s1148 + $0x18] sm:$0xff]
                  %1157 = vst [vmem:[%s1149 + $0x18] sm:$0xff] %v1156
                  %v1158 = vld [vmem:[%s1148 + $0x20] sm:$0xff]
                  %1159 = vst [vmem:[%s1149 + $0x20] sm:$0xff] %v1158
                  %v1160 = vld [vmem:[%s1148 + $0x28] sm:$0xff]
                  %1161 = vst [vmem:[%s1149 + $0x28] sm:$0xff] %v1160
                  %v1162 = vld [vmem:[%s1148 + $0x30] sm:$0xff]
                  %1163 = vst [vmem:[%s1149 + $0x30] sm:$0xff] %v1162
                  %v1164 = vld [vmem:[%s1148 + $0x38] sm:$0xff]
                  %1165 = vst [vmem:[%s1149 + $0x38] sm:$0xff] %v1164
                  %v1166 = vld [vmem:[%s1148 + $0x40] sm:$0xff]
                  %1167 = vst [vmem:[%s1149 + $0x40] sm:$0xff] %v1166
                  %v1168 = vld [vmem:[%s1148 + $0x48] sm:$0xff]
                  %1169 = vst [vmem:[%s1149 + $0x48] sm:$0xff] %v1168
                  %v1170 = vld [vmem:[%s1148 + $0x50] sm:$0xff]
                  %1171 = vst [vmem:[%s1149 + $0x50] sm:$0xff] %v1170
                  %v1172 = vld [vmem:[%s1148 + $0x58] sm:$0xff]
                  %1173 = vst [vmem:[%s1149 + $0x58] sm:$0xff] %v1172
                  %v1174 = vld [vmem:[%s1148 + $0x60] sm:$0xff]
                  %1175 = vst [vmem:[%s1149 + $0x60] sm:$0xff] %v1174
                  %v1176 = vld [vmem:[%s1148 + $0x68] sm:$0xff]
                  %1177 = vst [vmem:[%s1149 + $0x68] sm:$0xff] %v1176
                  %v1178 = vld [vmem:[%s1148 + $0x70] sm:$0xff]
                  %1179 = vst [vmem:[%s1149 + $0x70] sm:$0xff] %v1178
                  %v1180 = vld [vmem:[%s1148 + $0x78] sm:$0xff]
                  %1181 = vst [vmem:[%s1149 + $0x78] sm:$0xff] %v1180
                  %v1182 = vld [vmem:[%s1148 + $0x80] sm:$0xff]
                  %1183 = vst [vmem:[%s1149 + $0x80] sm:$0xff] %v1182
                  %v1184 = vld [vmem:[%s1148 + $0x88] sm:$0xff]
                  %1185 = vst [vmem:[%s1149 + $0x88] sm:$0xff] %v1184
                  %v1186 = vld [vmem:[%s1148 + $0x90] sm:$0xff]
                  %1187 = vst [vmem:[%s1149 + $0x90] sm:$0xff] %v1186
                  %v1188 = vld [vmem:[%s1148 + $0x98] sm:$0xff]
                  %1189 = vst [vmem:[%s1149 + $0x98] sm:$0xff] %v1188
                  %v1190 = vld [vmem:[%s1148 + $0xa0] sm:$0xff]
                  %1191 = vst [vmem:[%s1149 + $0xa0] sm:$0xff] %v1190
                  %v1192 = vld [vmem:[%s1148 + $0xa8] sm:$0xff]
                  %1193 = vst [vmem:[%s1149 + $0xa8] sm:$0xff] %v1192
                  %v1194 = vld [vmem:[%s1148 + $0xb0] sm:$0xff]
                  %1195 = vst [vmem:[%s1149 + $0xb0] sm:$0xff] %v1194
                  %v1196 = vld [vmem:[%s1148 + $0xb8] sm:$0xff]
                  %1197 = vst [vmem:[%s1149 + $0xb8] sm:$0xff] %v1196
                  %v1198 = vld [vmem:[%s1148 + $0xc0] sm:$0xff]
                  %1199 = vst [vmem:[%s1149 + $0xc0] sm:$0xff] %v1198
                  %v1200 = vld [vmem:[%s1148 + $0xc8] sm:$0xff]
                  %1201 = vst [vmem:[%s1149 + $0xc8] sm:$0xff] %v1200
                  %v1202 = vld [vmem:[%s1148 + $0xd0] sm:$0xff]
                  %1203 = vst [vmem:[%s1149 + $0xd0] sm:$0xff] %v1202
                  %v1204 = vld [vmem:[%s1148 + $0xd8] sm:$0xff]
                  %1205 = vst [vmem:[%s1149 + $0xd8] sm:$0xff] %v1204
                  %v1206 = vld [vmem:[%s1148 + $0xe0] sm:$0xff]
                  %1207 = vst [vmem:[%s1149 + $0xe0] sm:$0xff] %v1206
                  %v1208 = vld [vmem:[%s1148 + $0xe8] sm:$0xff]
                  %1209 = vst [vmem:[%s1149 + $0xe8] sm:$0xff] %v1208
                  %v1210 = vld [vmem:[%s1148 + $0xf0] sm:$0xff]
                  %1211 = vst [vmem:[%s1149 + $0xf0] sm:$0xff] %v1210
                  %v1212 = vld [vmem:[%s1148 + $0xf8] sm:$0xff]
                  %1213 = vst [vmem:[%s1149 + $0xf8] sm:$0xff] %v1212
                  %s1214 = sadd.s32 1, %s1147
                  %p1215 = scmp.ge.s32.totalorder %s1214, %s1140
                  %s1216 = scalar_select %p1215, 0, %s1214
                  %s1217 = smul.u32 %s1216, 256
                  %s1218 = smul.u32 %s1216, 256
                  %s1219 = scalar_lea.vmem %s1097, %s1217 [#allocation4]
                  %s1220 = scalar_lea.vmem %s1110, %s1218
                $region76: #{forward.1} parent=70 // loop_footer
                  %s1144 = sadd.s32 %s1142, 1
                $region77: #{forward.1} parent=70 // loop_footer_branch
                  %1141 = sbr.rel target = $region73
                $region78: #{forward.1} parent=70 // loop_exit
                  _
                %s1221 = sshrl.u32 %s1139, 5
                %s1222 = sand.u32 %s1139, 31
                %s1223 = smul.u32 %s1221, 32
                %s1224 = smul.u32 8, %s1223
                %s1225 = scalar_lea.vmem %s1097, %s1224 [#allocation4]
                %s1226 = smul.u32 8, %s1223
                %s1227 = scalar_lea.vmem %s1110, %s1226
                // While loop
                $region79: #{forward.1} parent=70 // loop_pre_header
                  _
                $region80: #{forward.1} parent=70 // loop_header
                  %s1229 = sphi 0, %s1231
                  %p1230 = scmp.ge.s32.totalorder %s1229, %s1222
                  %s1234 = sphi 0, %s1241
                  %s1235 = sphi %s1225, %s1244
                  %s1236 = sphi %s1227, %s1245
                $region81: #{forward.1} parent=70 // loop_header_branch
                  %1233 = sbr.rel (%p1230) target = $region85
                $region82: #{forward.1} parent=70 // loop_body
                  %v1237 = vld [vmem:[%s1235] sm:$0xff]
                  %1238 = vst [vmem:[%s1236] sm:$0xff] %v1237
                  %s1239 = sadd.s32 1, %s1234
                  %p1240 = scmp.ge.s32.totalorder %s1239, %s1222
                  %s1241 = scalar_select %p1240, 0, %s1239
                  %s1242 = smul.u32 %s1241, 8
                  %s1243 = smul.u32 %s1241, 8
                  %s1244 = scalar_lea.vmem %s1225, %s1242 [#allocation4]
                  %s1245 = scalar_lea.vmem %s1227, %s1243
                $region83: #{forward.1} parent=70 // loop_footer
                  %s1231 = sadd.s32 %s1229, 1
                $region84: #{forward.1} parent=70 // loop_footer_branch
                  %1228 = sbr.rel target = $region80
                $region85: #{forward.1} parent=70 // loop_exit
                  _
              $region71: #{forward.1} parent=55 // pred_fallthru
                _
              %p1246 = pneg %p1135
              // Predicated region
              $region86: #{forward.1} parent=55 // pred_check
                _
              $region87: #{forward.1} parent=55 // pred_check_branch
                %1248 = sbr.rel (%p1135) target = $region89
              $region88: #{forward.1} parent=55 // pred_region
                %s1249 = sand.u32 %s1111, 7
                %s1250 = ssub.s32 %s1111, %s1249
                %s1251 = scalar_lea.vmem %s1097, %s1250 [#allocation4]
                %s1252 = ssub.s32 %s1111, %s1249
                %s1253 = scalar_lea.vmem %s1110, %s1252
                %s1254 = sshrl.u32 %s1111, 3
                %s1255 = sshrl.u32 %s1254, 5
                // While loop
                $region90: #{forward.1} parent=88 // loop_pre_header
                  _
                $region91: #{forward.1} parent=88 // loop_header
                  %s1257 = sphi 0, %s1259
                  %p1258 = scmp.ge.s32.totalorder %s1257, %s1255
                  %s1262 = sphi 0, %s1331
                  %s1263 = sphi %s1097, %s1334
                  %s1264 = sphi %s1110, %s1335
                $region92: #{forward.1} parent=88 // loop_header_branch
                  %1261 = sbr.rel (%p1258) target = $region96
                $region93: #{forward.1} parent=88 // loop_body
                  %v1265 = vld [vmem:[%s1263] sm:$0xff]
                  %1266 = vst [vmem:[%s1264] sm:$0xff] %v1265
                  %v1267 = vld [vmem:[%s1263 + $0x8] sm:$0xff]
                  %1268 = vst [vmem:[%s1264 + $0x8] sm:$0xff] %v1267
                  %v1269 = vld [vmem:[%s1263 + $0x10] sm:$0xff]
                  %1270 = vst [vmem:[%s1264 + $0x10] sm:$0xff] %v1269
                  %v1271 = vld [vmem:[%s1263 + $0x18] sm:$0xff]
                  %1272 = vst [vmem:[%s1264 + $0x18] sm:$0xff] %v1271
                  %v1273 = vld [vmem:[%s1263 + $0x20] sm:$0xff]
                  %1274 = vst [vmem:[%s1264 + $0x20] sm:$0xff] %v1273
                  %v1275 = vld [vmem:[%s1263 + $0x28] sm:$0xff]
                  %1276 = vst [vmem:[%s1264 + $0x28] sm:$0xff] %v1275
                  %v1277 = vld [vmem:[%s1263 + $0x30] sm:$0xff]
                  %1278 = vst [vmem:[%s1264 + $0x30] sm:$0xff] %v1277
                  %v1279 = vld [vmem:[%s1263 + $0x38] sm:$0xff]
                  %1280 = vst [vmem:[%s1264 + $0x38] sm:$0xff] %v1279
                  %v1281 = vld [vmem:[%s1263 + $0x40] sm:$0xff]
                  %1282 = vst [vmem:[%s1264 + $0x40] sm:$0xff] %v1281
                  %v1283 = vld [vmem:[%s1263 + $0x48] sm:$0xff]
                  %1284 = vst [vmem:[%s1264 + $0x48] sm:$0xff] %v1283
                  %v1285 = vld [vmem:[%s1263 + $0x50] sm:$0xff]
                  %1286 = vst [vmem:[%s1264 + $0x50] sm:$0xff] %v1285
                  %v1287 = vld [vmem:[%s1263 + $0x58] sm:$0xff]
                  %1288 = vst [vmem:[%s1264 + $0x58] sm:$0xff] %v1287
                  %v1289 = vld [vmem:[%s1263 + $0x60] sm:$0xff]
                  %1290 = vst [vmem:[%s1264 + $0x60] sm:$0xff] %v1289
                  %v1291 = vld [vmem:[%s1263 + $0x68] sm:$0xff]
                  %1292 = vst [vmem:[%s1264 + $0x68] sm:$0xff] %v1291
                  %v1293 = vld [vmem:[%s1263 + $0x70] sm:$0xff]
                  %1294 = vst [vmem:[%s1264 + $0x70] sm:$0xff] %v1293
                  %v1295 = vld [vmem:[%s1263 + $0x78] sm:$0xff]
                  %1296 = vst [vmem:[%s1264 + $0x78] sm:$0xff] %v1295
                  %v1297 = vld [vmem:[%s1263 + $0x80] sm:$0xff]
                  %1298 = vst [vmem:[%s1264 + $0x80] sm:$0xff] %v1297
                  %v1299 = vld [vmem:[%s1263 + $0x88] sm:$0xff]
                  %1300 = vst [vmem:[%s1264 + $0x88] sm:$0xff] %v1299
                  %v1301 = vld [vmem:[%s1263 + $0x90] sm:$0xff]
                  %1302 = vst [vmem:[%s1264 + $0x90] sm:$0xff] %v1301
                  %v1303 = vld [vmem:[%s1263 + $0x98] sm:$0xff]
                  %1304 = vst [vmem:[%s1264 + $0x98] sm:$0xff] %v1303
                  %v1305 = vld [vmem:[%s1263 + $0xa0] sm:$0xff]
                  %1306 = vst [vmem:[%s1264 + $0xa0] sm:$0xff] %v1305
                  %v1307 = vld [vmem:[%s1263 + $0xa8] sm:$0xff]
                  %1308 = vst [vmem:[%s1264 + $0xa8] sm:$0xff] %v1307
                  %v1309 = vld [vmem:[%s1263 + $0xb0] sm:$0xff]
                  %1310 = vst [vmem:[%s1264 + $0xb0] sm:$0xff] %v1309
                  %v1311 = vld [vmem:[%s1263 + $0xb8] sm:$0xff]
                  %1312 = vst [vmem:[%s1264 + $0xb8] sm:$0xff] %v1311
                  %v1313 = vld [vmem:[%s1263 + $0xc0] sm:$0xff]
                  %1314 = vst [vmem:[%s1264 + $0xc0] sm:$0xff] %v1313
                  %v1315 = vld [vmem:[%s1263 + $0xc8] sm:$0xff]
                  %1316 = vst [vmem:[%s1264 + $0xc8] sm:$0xff] %v1315
                  %v1317 = vld [vmem:[%s1263 + $0xd0] sm:$0xff]
                  %1318 = vst [vmem:[%s1264 + $0xd0] sm:$0xff] %v1317
                  %v1319 = vld [vmem:[%s1263 + $0xd8] sm:$0xff]
                  %1320 = vst [vmem:[%s1264 + $0xd8] sm:$0xff] %v1319
                  %v1321 = vld [vmem:[%s1263 + $0xe0] sm:$0xff]
                  %1322 = vst [vmem:[%s1264 + $0xe0] sm:$0xff] %v1321
                  %v1323 = vld [vmem:[%s1263 + $0xe8] sm:$0xff]
                  %1324 = vst [vmem:[%s1264 + $0xe8] sm:$0xff] %v1323
                  %v1325 = vld [vmem:[%s1263 + $0xf0] sm:$0xff]
                  %1326 = vst [vmem:[%s1264 + $0xf0] sm:$0xff] %v1325
                  %v1327 = vld [vmem:[%s1263 + $0xf8] sm:$0xff]
                  %1328 = vst [vmem:[%s1264 + $0xf8] sm:$0xff] %v1327
                  %s1329 = sadd.s32 1, %s1262
                  %p1330 = scmp.ge.s32.totalorder %s1329, %s1255
                  %s1331 = scalar_select %p1330, 0, %s1329
                  %s1332 = smul.u32 %s1331, 256
                  %s1333 = smul.u32 %s1331, 256
                  %s1334 = scalar_lea.vmem %s1097, %s1332 [#allocation4]
                  %s1335 = scalar_lea.vmem %s1110, %s1333
                $region94: #{forward.1} parent=88 // loop_footer
                  %s1259 = sadd.s32 %s1257, 1
                $region95: #{forward.1} parent=88 // loop_footer_branch
                  %1256 = sbr.rel target = $region91
                $region96: #{forward.1} parent=88 // loop_exit
                  _
                %s1336 = sshrl.u32 %s1254, 5
                %s1337 = sand.u32 %s1254, 31
                %s1338 = smul.u32 %s1336, 32
                %s1339 = smul.u32 8, %s1338
                %s1340 = scalar_lea.vmem %s1097, %s1339 [#allocation4]
                %s1341 = smul.u32 8, %s1338
                %s1342 = scalar_lea.vmem %s1110, %s1341
                // While loop
                $region97: #{forward.1} parent=88 // loop_pre_header
                  _
                $region98: #{forward.1} parent=88 // loop_header
                  %s1344 = sphi 0, %s1346
                  %p1345 = scmp.ge.s32.totalorder %s1344, %s1337
                  %s1349 = sphi 0, %s1356
                  %s1350 = sphi %s1340, %s1359
                  %s1351 = sphi %s1342, %s1360
                $region99: #{forward.1} parent=88 // loop_header_branch
                  %1348 = sbr.rel (%p1345) target = $region103
                $region100: #{forward.1} parent=88 // loop_body
                  %v1352 = vld [vmem:[%s1350] sm:$0xff]
                  %1353 = vst [vmem:[%s1351] sm:$0xff] %v1352
                  %s1354 = sadd.s32 1, %s1349
                  %p1355 = scmp.ge.s32.totalorder %s1354, %s1337
                  %s1356 = scalar_select %p1355, 0, %s1354
                  %s1357 = smul.u32 %s1356, 8
                  %s1358 = smul.u32 %s1356, 8
                  %s1359 = scalar_lea.vmem %s1340, %s1357 [#allocation4]
                  %s1360 = scalar_lea.vmem %s1342, %s1358
                $region101: #{forward.1} parent=88 // loop_footer
                  %s1346 = sadd.s32 %s1344, 1
                $region102: #{forward.1} parent=88 // loop_footer_branch
                  %1343 = sbr.rel target = $region98
                $region103: #{forward.1} parent=88 // loop_exit
                  _
                %s1361 = sshll.u32 1, %s1249
                %s1362 = ssub.s32 %s1361, 1
                loop: start=0, step=1, limit=1
                $region104: #{forward.1} parent=88 // loop_pre_header
                  _
                $region105: #{forward.1} parent=88 // loop_header
                  %s1364 = sphi 0, %s1368
                  %p1365 = scmp.ge.s32.totalorder %s1364, 1
                  %s1369 = sphi %s1251, %s1251
                  %s1370 = sphi %s1253, %s1253
                $region106: #{forward.1} parent=88 // loop_header_branch
                  %1367 = sbr.rel (%p1365) target = $region110
                $region107: #{forward.1} parent=88 // loop_body
                  %v1371 = vld [vmem:[%s1369] sm:%s1362]
                  %1372 = vst [vmem:[%s1370] sm:%s1362] %v1371
                $region108: #{forward.1} parent=88 // loop_footer
                  %s1368 = sadd.s32 1, %s1364
                $region109: #{forward.1} parent=88 // loop_footer_branch
                  %1363 = sbr.rel target = $region105
                $region110: #{forward.1} parent=88 // loop_exit
                  _
              $region89: #{forward.1} parent=55 // pred_fallthru
                _
            $region56: #{forward.1} parent=51 // pred_fallthru
              _
            // Predicated region
            $region57: #{forward.1} parent=51 // pred_check
              %p1119 = pneg %p1115
            $region58: #{forward.1} parent=51 // pred_check_branch
              %1121 = sbr.rel (%p1119) target = $region60
            $region59: #{forward.1} parent=51 // pred_region
              %s1122 = sshll.u32 1, %s1111
              %s1123 = ssub.s32 %s1122, 1
              loop: start=0, step=1, limit=1
              $region61: #{forward.1} parent=59 // loop_pre_header
                _
              $region62: #{forward.1} parent=59 // loop_header
                %s1125 = sphi 0, %s1129
                %p1126 = scmp.ge.s32.totalorder %s1125, 1
                %s1130 = sphi %s1097, %s1097
                %s1131 = sphi %s1110, %s1110
              $region63: #{forward.1} parent=59 // loop_header_branch
                %1128 = sbr.rel (%p1126) target = $region67
              $region64: #{forward.1} parent=59 // loop_body
                %v1132 = vld [vmem:[%s1130] sm:%s1123]
                %1133 = vst [vmem:[%s1131] sm:%s1123] %v1132
              $region65: #{forward.1} parent=59 // loop_footer
                %s1129 = sadd.s32 1, %s1125
              $region66: #{forward.1} parent=59 // loop_footer_branch
                %1124 = sbr.rel target = $region62
              $region67: #{forward.1} parent=59 // loop_exit
                _
            $region60: #{forward.1} parent=51 // pred_fallthru
              _
          $region52: #{forward.1} parent=47 // pred_fallthru
            _
          %1373 = vnop
        $region48: #{forward.1} parent=39 // pred_fallthru
          _
      $region40: #{forward.1} parent=5 // pred_fallthru
        _
      %p1374 = scmp.le.s32.totalorder 2, %s12
      // Predicated region
      $region111: #{forward.1} parent=5 // pred_check
        %p1375 = pneg %p1374
      $region112: #{forward.1} parent=5 // pred_check_branch
        %1377 = sbr.rel (%p1375) target = $region114
      $region113: #{forward.1} parent=5 // pred_region
        %s1378 = ssub.s32 %s12, 2
        // Predicated region
        $region115: #{forward.1} parent=113 // pred_check
          %p1379 = pneg %p244
        $region116: #{forward.1} parent=113 // pred_check_branch
          %1381 = sbr.rel (%p1379) target = $region118
        $region117: #{forward.1} parent=113 // pred_region
          %s1382 = sand.u32 %s229, 1
          %s1383 = sand.u32 %s229, 1
          %s1384 = smul.addr %s1383, 4
          %s1385 = scalar_lea.vmem [#allocation4], %s1384
        $region118: #{forward.1} parent=113 // pred_fallthru
          _
      $region114: #{forward.1} parent=5 // pred_fallthru
        _
    $region6: #{forward.1} parent=1 // loop_footer
      %s16 = sadd.s32 1, %s12
    $region7: #{forward.1} parent=1 // loop_footer_branch
      %11 = sbr.rel target = $region3
    $region8: #{forward.1} parent=1 // loop_exit
      _
    %1386 = vsyncpa [#allocation3], 1
    %s1387 = scalar_lea.sflag [#allocation3], 1
    %1388 = vsyncpa %s1387, 1

</llo_original>
